<compile_context>
chip_gen: v7x
topology: tpu7x:2x2x1
jax: 0.10.0
libtpu: 0.0.40
codegen_flags: <defaults>
</compile_context>

<pallas_src>
import functools

import jax
import jax.numpy as jnp
from jax.experimental import pallas as pl


# ----------------------------------------------------------------------------
# Fused Pallas kernel: num_layers LSTM layers + final Linear, single invocation
# ----------------------------------------------------------------------------
def lstm_net_kernel(*refs, hidden_dim, seq_len, batch, num_layers):
    """refs layout:
      refs[0]               x_ref  : (T*B, D0)   time-major flattened input
      refs[1 + 3*l]         wih_l  : (D_l, 4H)   W_ih^T for layer l
      refs[2 + 3*l]         whh_l  : (H,   4H)   W_hh^T for layer l
      refs[3 + 3*l]         b_l    : (1,   4H)   b_ih + b_hh
      refs[1 + 3*L]         wfc    : (H, O)      fc weight^T
      refs[2 + 3*L]         bfc    : (1, O)      fc bias
      refs[3 + 3*L]         o_ref  : (B, O)      output
    """
    x_ref = refs[0]
    wih_refs = [refs[1 + 3 * l] for l in range(num_layers)]
    whh_refs = [refs[2 + 3 * l] for l in range(num_layers)]
    b_refs = [refs[3 + 3 * l] for l in range(num_layers)]
    wfc_ref = refs[1 + 3 * num_layers]
    bfc_ref = refs[2 + 3 * num_layers]
    o_ref = refs[3 + 3 * num_layers]

    H, T, B = hidden_dim, seq_len, batch
    zeros = jnp.zeros((B, H), jnp.float32)

    seq_flat = x_ref[...]                     # (T*B, D0), rows t-major
    h_last = zeros
    for l in range(num_layers):
        # ---- hoisted input projection for ALL timesteps: one MXU dot ------
        gates_all = (jnp.dot(seq_flat, wih_refs[l][...],
                             preferred_element_type=jnp.float32)
                     + b_refs[l][...])        # (T*B, 4H), bias folded once
        # static contiguous per-timestep slices (off the recurrence path)
        g_t = [gates_all[t * B:(t + 1) * B] for t in range(T)]

        w_hh = whh_refs[l][...]               # (H, 4H), loaded once per layer
        h = zeros
        c = zeros
        outs = []
        for t in range(T):                    # fully unrolled (T = 8)
            # only recurrence-dependent matmul left on the serial chain
            gates = g_t[t] + jnp.dot(h, w_hh,
                                     preferred_element_type=jnp.float32)
            i_g = jax.nn.sigmoid(gates[:, 0 * H:1 * H])
            f_g = jax.nn.sigmoid(gates[:, 1 * H:2 * H])
            g_g = jnp.tanh(gates[:, 2 * H:3 * H])
            o_g = jax.nn.sigmoid(gates[:, 3 * H:4 * H])
            c = f_g * c + i_g * g_g
            h = o_g * jnp.tanh(c)
            outs.append(h)
        h_last = h
        if l + 1 < num_layers:
            # hidden sequence for the next layer, t-major (T*B, H)
            seq_flat = jnp.concatenate(outs, axis=0)

    # Final Linear on the top layer's last-timestep hidden state.
    o_ref[...] = (jnp.dot(h_last, wfc_ref[...],
                          preferred_element_type=jnp.float32)
                  + bfc_ref[...]).astype(o_ref.dtype)


# ----------------------------------------------------------------------------
# One-time parameter preparation (transpose, fold biases; W_ih/W_hh kept apart)
# ----------------------------------------------------------------------------
def prepare_params(params):
    prepped = {"layers": []}
    for layer in params["lstm"]:
        prepped["layers"].append((
            jnp.transpose(layer["w_ih"]),                     # (D_l, 4H)
            jnp.transpose(layer["w_hh"]),                     # (H,   4H)
            (layer["b_ih"] + layer["b_hh"]).reshape(1, -1),   # (1,   4H)
        ))
    prepped["fc_w"] = jnp.transpose(params["fc_w"])           # (H, O)
    prepped["fc_b"] = params["fc_b"].reshape(1, -1)           # (1, O)
    return prepped


# ----------------------------------------------------------------------------
# Forward wrapper (single pallas_call, no grid)
# ----------------------------------------------------------------------------
def lstm_net_forward(x_btd, prepped, hidden_dim):
    """Equivalent of LSTM_Net.forward. x_btd: (B, T, D_in) -> (B, O)."""
    B, T, D = x_btd.shape
    num_layers = len(prepped["layers"])
    O = prepped["fc_w"].shape[1]

    # Tiny one-off relayout (256 B here) so the kernel only ever takes
    # contiguous static sublane slices of the precomputed gate rows.
    x_flat = jnp.transpose(x_btd, (1, 0, 2)).reshape(T * B, D)

    def full2d(a):
        return pl.BlockSpec(a.shape, lambda: (0, 0))

    in_specs = [full2d(x_flat)]
    operands = [x_flat]
    for w_ih, w_hh, b in prepped["layers"]:
        in_specs += [full2d(w_ih), full2d(w_hh), full2d(b)]
        operands += [w_ih, w_hh, b]
    in_specs += [full2d(prepped["fc_w"]), full2d(prepped["fc_b"])]
    operands += [prepped["fc_w"], prepped["fc_b"]]

    kernel = functools.partial(lstm_net_kernel, hidden_dim=hidden_dim,
                               seq_len=T, batch=B, num_layers=num_layers)
    return pl.pallas_call(
        kernel,
        out_shape=jax.ShapeDtypeStruct((B, O), jnp.float32),
        in_specs=in_specs,
        out_specs=pl.BlockSpec((B, O), lambda: (0, 0)),
    )(*operands)


# ----------------------------------------------------------------------------
# Pure-JAX reference (for numerical verification)
# ----------------------------------------------------------------------------
def lstm_net_reference(x_btd, params, hidden_dim):
    B = x_btd.shape[0]
    x = x_btd
    for layer in params["lstm"]:
        w_ih, w_hh = layer["w_ih"], layer["w_hh"]
        b = layer["b_ih"] + layer["b_hh"]
        h = jnp.zeros((B, hidden_dim), jnp.float32)
        c = jnp.zeros((B, hidden_dim), jnp.float32)
        outs = []
        for t in range(x.shape[1]):
            gates = x[:, t, :] @ w_ih.T + h @ w_hh.T + b
            i_g = jax.nn.sigmoid(gates[:, 0 * hidden_dim:1 * hidden_dim])
            f_g = jax.nn.sigmoid(gates[:, 1 * hidden_dim:2 * hidden_dim])
            g_g = jnp.tanh(gates[:, 2 * hidden_dim:3 * hidden_dim])
            o_g = jax.nn.sigmoid(gates[:, 3 * hidden_dim:4 * hidden_dim])
            c = f_g * c + i_g * g_g
            h = o_g * jnp.tanh(c)
            outs.append(h)
        x = jnp.stack(outs, axis=1)
    return x[:, -1, :] @ params["fc_w"].T + params["fc_b"]


# ----------------------------------------------------------------------------
# Parameter init (deterministic, PyTorch-style uniform(-1/sqrt(H), 1/sqrt(H)))
# ----------------------------------------------------------------------------
def init_params(key, input_dim, hidden_dim, num_layers, output_dim):
    params = {"lstm": []}
    bound = 1.0 / jnp.sqrt(hidden_dim)
    for layer in range(num_layers):
        d_in = input_dim if layer == 0 else hidden_dim
        key, k1, k2, k3, k4 = jax.random.split(key, 5)
        params["lstm"].append({
            "w_ih": jax.random.uniform(k1, (4 * hidden_dim, d_in),
                                       jnp.float32, -bound, bound),
            "w_hh": jax.random.uniform(k2, (4 * hidden_dim, hidden_dim),
                                       jnp.float32, -bound, bound),
            "b_ih": jax.random.uniform(k3, (4 * hidden_dim,),
                                       jnp.float32, -bound, bound),
            "b_hh": jax.random.uniform(k4, (4 * hidden_dim,),
                                       jnp.float32, -bound, bound),
        })
    key, k5, k6 = jax.random.split(key, 3)
    fc_bound = 1.0 / jnp.sqrt(hidden_dim)
    params["fc_w"] = jax.random.uniform(k5, (output_dim, hidden_dim),
                                        jnp.float32, -fc_bound, fc_bound)
    params["fc_b"] = jax.random.uniform(k6, (output_dim,),
                                        jnp.float32, -fc_bound, fc_bound)
    return params


# ----------------------------------------------------------------------------
if __name__ == "__main__":
    INPUT_DIM = 4
    HIDDEN_DIM = 32
    NUM_LAYERS = 2
    OUTPUT_DIM = 4
    BATCH = 2
    SEQ = 8

    key = jax.random.PRNGKey(0)
    key, pkey, xkey = jax.random.split(key, 3)
    params = init_params(pkey, INPUT_DIM, HIDDEN_DIM, NUM_LAYERS, OUTPUT_DIM)
    prepped = prepare_params(params)   # one-time weight prep (transpose/fold)
    x = jax.random.normal(xkey, (BATCH, SEQ, INPUT_DIM), jnp.float32)

    out = lstm_net_forward(x, prepped, HIDDEN_DIM)
    out = jax.block_until_ready(out)

    ref = lstm_net_reference(x, params, HIDDEN_DIM)
    assert out.shape == (BATCH, OUTPUT_DIM), out.shape
    assert jnp.allclose(out, ref, atol=1e-5, rtol=1e-5), (out, ref)

    print("KERNEL_OK")
</pallas_src>

<mosaic_0001>
module attributes {stable_mosaic.version = 11 : i64} {
  func.func @lstm_net_kernel(%arg0: memref<16x4xf32, #tpu.memory_space<vmem>>, %arg1: memref<4x128xf32, #tpu.memory_space<vmem>>, %arg2: memref<32x128xf32, #tpu.memory_space<vmem>>, %arg3: memref<1x128xf32, #tpu.memory_space<vmem>>, %arg4: memref<32x128xf32, #tpu.memory_space<vmem>>, %arg5: memref<32x128xf32, #tpu.memory_space<vmem>>, %arg6: memref<1x128xf32, #tpu.memory_space<vmem>>, %arg7: memref<32x4xf32, #tpu.memory_space<vmem>>, %arg8: memref<1x4xf32, #tpu.memory_space<vmem>>, %arg9: memref<2x4xf32, #tpu.memory_space<vmem>>) attributes {dimension_semantics = [], scalar_prefetch = 0 : i64, scratch_operands = 0 : i64, tpu.core_type = #tpu.core_type<tc>} {
    %cst = arith.constant 0.000000e+00 : f32
    %0 = vector.broadcast %cst : f32 to vector<2x32xf32>
    %c0 = arith.constant 0 : index
    %c0_0 = arith.constant 0 : index
    %1 = vector.load %arg0[%c0, %c0_0] : memref<16x4xf32, #tpu.memory_space<vmem>>, vector<16x4xf32>
    %c0_1 = arith.constant 0 : index
    %c0_2 = arith.constant 0 : index
    %2 = vector.load %arg1[%c0_1, %c0_2] : memref<4x128xf32, #tpu.memory_space<vmem>>, vector<4x128xf32>
    %cst_3 = arith.constant dense<0.000000e+00> : vector<16x128xf32>
    %3 = tpu.matmul %1, %2, %cst_3 {dimension_numbers = #tpu.dot_dimension_numbers<[1], [0], [0], [1], [0, 0, 1, 1], [], []>} : vector<16x4xf32>, vector<4x128xf32>, vector<16x128xf32> -> vector<16x128xf32>
    %c0_4 = arith.constant 0 : index
    %c0_5 = arith.constant 0 : index
    %4 = vector.load %arg3[%c0_4, %c0_5] : memref<1x128xf32, #tpu.memory_space<vmem>>, vector<1x128xf32>
    %5 = vector.broadcast %4 : vector<1x128xf32> to vector<16x128xf32>
    %6 = arith.addf %3, %5 : vector<16x128xf32>
    %7 = vector.extract_strided_slice %6 {offsets = [0, 0], sizes = [2, 128], strides = [1, 1]} : vector<16x128xf32> to vector<2x128xf32>
    %8 = vector.extract_strided_slice %6 {offsets = [2, 0], sizes = [2, 128], strides = [1, 1]} : vector<16x128xf32> to vector<2x128xf32>
    %9 = vector.extract_strided_slice %6 {offsets = [4, 0], sizes = [2, 128], strides = [1, 1]} : vector<16x128xf32> to vector<2x128xf32>
    %10 = vector.extract_strided_slice %6 {offsets = [6, 0], sizes = [2, 128], strides = [1, 1]} : vector<16x128xf32> to vector<2x128xf32>
    %11 = vector.extract_strided_slice %6 {offsets = [8, 0], sizes = [2, 128], strides = [1, 1]} : vector<16x128xf32> to vector<2x128xf32>
    %12 = vector.extract_strided_slice %6 {offsets = [10, 0], sizes = [2, 128], strides = [1, 1]} : vector<16x128xf32> to vector<2x128xf32>
    %13 = vector.extract_strided_slice %6 {offsets = [12, 0], sizes = [2, 128], strides = [1, 1]} : vector<16x128xf32> to vector<2x128xf32>
    %14 = vector.extract_strided_slice %6 {offsets = [14, 0], sizes = [2, 128], strides = [1, 1]} : vector<16x128xf32> to vector<2x128xf32>
    %c0_6 = arith.constant 0 : index
    %c0_7 = arith.constant 0 : index
    %15 = vector.load %arg2[%c0_6, %c0_7] : memref<32x128xf32, #tpu.memory_space<vmem>>, vector<32x128xf32>
    %cst_8 = arith.constant dense<0.000000e+00> : vector<2x128xf32>
    %16 = tpu.matmul %0, %15, %cst_8 {dimension_numbers = #tpu.dot_dimension_numbers<[1], [0], [0], [1], [0, 0, 1, 1], [], []>} : vector<2x32xf32>, vector<32x128xf32>, vector<2x128xf32> -> vector<2x128xf32>
    %17 = arith.addf %7, %16 : vector<2x128xf32>
    %18 = vector.extract_strided_slice %17 {offsets = [0, 0], sizes = [2, 32], strides = [1, 1]} : vector<2x128xf32> to vector<2x32xf32>
    %19 = arith.negf %18 : vector<2x32xf32>
    %20 = math.exp %19 : vector<2x32xf32>
    %cst_9 = arith.constant 1.000000e+00 : f32
    %21 = vector.broadcast %cst_9 : f32 to vector<2x32xf32>
    %22 = arith.addf %21, %20 : vector<2x32xf32>
    %23 = arith.divf %21, %22 : vector<2x32xf32>
    %24 = vector.extract_strided_slice %17 {offsets = [0, 32], sizes = [2, 32], strides = [1, 1]} : vector<2x128xf32> to vector<2x32xf32>
    %25 = arith.negf %24 : vector<2x32xf32>
    %26 = math.exp %25 : vector<2x32xf32>
    %cst_10 = arith.constant 1.000000e+00 : f32
    %27 = vector.broadcast %cst_10 : f32 to vector<2x32xf32>
    %28 = arith.addf %27, %26 : vector<2x32xf32>
    %29 = arith.divf %27, %28 : vector<2x32xf32>
    %30 = vector.extract_strided_slice %17 {offsets = [0, 64], sizes = [2, 32], strides = [1, 1]} : vector<2x128xf32> to vector<2x32xf32>
    %31 = math.tanh %30 : vector<2x32xf32>
    %32 = vector.extract_strided_slice %17 {offsets = [0, 96], sizes = [2, 32], strides = [1, 1]} : vector<2x128xf32> to vector<2x32xf32>
    %33 = arith.negf %32 : vector<2x32xf32>
    %34 = math.exp %33 : vector<2x32xf32>
    %cst_11 = arith.constant 1.000000e+00 : f32
    %35 = vector.broadcast %cst_11 : f32 to vector<2x32xf32>
    %36 = arith.addf %35, %34 : vector<2x32xf32>
    %37 = arith.divf %35, %36 : vector<2x32xf32>
    %38 = arith.mulf %29, %0 : vector<2x32xf32>
    %39 = arith.mulf %23, %31 : vector<2x32xf32>
    %40 = arith.addf %38, %39 : vector<2x32xf32>
    %41 = math.tanh %40 : vector<2x32xf32>
    %42 = arith.mulf %37, %41 : vector<2x32xf32>
    %cst_12 = arith.constant dense<0.000000e+00> : vector<2x128xf32>
    %43 = tpu.matmul %42, %15, %cst_12 {dimension_numbers = #tpu.dot_dimension_numbers<[1], [0], [0], [1], [0, 0, 1, 1], [], []>} : vector<2x32xf32>, vector<32x128xf32>, vector<2x128xf32> -> vector<2x128xf32>
    %44 = arith.addf %8, %43 : vector<2x128xf32>
    %45 = vector.extract_strided_slice %44 {offsets = [0, 0], sizes = [2, 32], strides = [1, 1]} : vector<2x128xf32> to vector<2x32xf32>
    %46 = arith.negf %45 : vector<2x32xf32>
    %47 = math.exp %46 : vector<2x32xf32>
    %cst_13 = arith.constant 1.000000e+00 : f32
    %48 = vector.broadcast %cst_13 : f32 to vector<2x32xf32>
    %49 = arith.addf %48, %47 : vector<2x32xf32>
    %50 = arith.divf %48, %49 : vector<2x32xf32>
    %51 = vector.extract_strided_slice %44 {offsets = [0, 32], sizes = [2, 32], strides = [1, 1]} : vector<2x128xf32> to vector<2x32xf32>
    %52 = arith.negf %51 : vector<2x32xf32>
    %53 = math.exp %52 : vector<2x32xf32>
    %cst_14 = arith.constant 1.000000e+00 : f32
    %54 = vector.broadcast %cst_14 : f32 to vector<2x32xf32>
    %55 = arith.addf %54, %53 : vector<2x32xf32>
    %56 = arith.divf %54, %55 : vector<2x32xf32>
    %57 = vector.extract_strided_slice %44 {offsets = [0, 64], sizes = [2, 32], strides = [1, 1]} : vector<2x128xf32> to vector<2x32xf32>
    %58 = math.tanh %57 : vector<2x32xf32>
    %59 = vector.extract_strided_slice %44 {offsets = [0, 96], sizes = [2, 32], strides = [1, 1]} : vector<2x128xf32> to vector<2x32xf32>
    %60 = arith.negf %59 : vector<2x32xf32>
    %61 = math.exp %60 : vector<2x32xf32>
    %cst_15 = arith.constant 1.000000e+00 : f32
    %62 = vector.broadcast %cst_15 : f32 to vector<2x32xf32>
    %63 = arith.addf %62, %61 : vector<2x32xf32>
    %64 = arith.divf %62, %63 : vector<2x32xf32>
    %65 = arith.mulf %56, %40 : vector<2x32xf32>
    %66 = arith.mulf %50, %58 : vector<2x32xf32>
    %67 = arith.addf %65, %66 : vector<2x32xf32>
    %68 = math.tanh %67 : vector<2x32xf32>
    %69 = arith.mulf %64, %68 : vector<2x32xf32>
    %cst_16 = arith.constant dense<0.000000e+00> : vector<2x128xf32>
    %70 = tpu.matmul %69, %15, %cst_16 {dimension_numbers = #tpu.dot_dimension_numbers<[1], [0], [0], [1], [0, 0, 1, 1], [], []>} : vector<2x32xf32>, vector<32x128xf32>, vector<2x128xf32> -> vector<2x128xf32>
    %71 = arith.addf %9, %70 : vector<2x128xf32>
    %72 = vector.extract_strided_slice %71 {offsets = [0, 0], sizes = [2, 32], strides = [1, 1]} : vector<2x128xf32> to vector<2x32xf32>
    %73 = arith.negf %72 : vector<2x32xf32>
    %74 = math.exp %73 : vector<2x32xf32>
    %cst_17 = arith.constant 1.000000e+00 : f32
    %75 = vector.broadcast %cst_17 : f32 to vector<2x32xf32>
    %76 = arith.addf %75, %74 : vector<2x32xf32>
    %77 = arith.divf %75, %76 : vector<2x32xf32>
    %78 = vector.extract_strided_slice %71 {offsets = [0, 32], sizes = [2, 32], strides = [1, 1]} : vector<2x128xf32> to vector<2x32xf32>
    %79 = arith.negf %78 : vector<2x32xf32>
    %80 = math.exp %79 : vector<2x32xf32>
    %cst_18 = arith.constant 1.000000e+00 : f32
    %81 = vector.broadcast %cst_18 : f32 to vector<2x32xf32>
    %82 = arith.addf %81, %80 : vector<2x32xf32>
    %83 = arith.divf %81, %82 : vector<2x32xf32>
    %84 = vector.extract_strided_slice %71 {offsets = [0, 64], sizes = [2, 32], strides = [1, 1]} : vector<2x128xf32> to vector<2x32xf32>
    %85 = math.tanh %84 : vector<2x32xf32>
    %86 = vector.extract_strided_slice %71 {offsets = [0, 96], sizes = [2, 32], strides = [1, 1]} : vector<2x128xf32> to vector<2x32xf32>
    %87 = arith.negf %86 : vector<2x32xf32>
    %88 = math.exp %87 : vector<2x32xf32>
    %cst_19 = arith.constant 1.000000e+00 : f32
    %89 = vector.broadcast %cst_19 : f32 to vector<2x32xf32>
    %90 = arith.addf %89, %88 : vector<2x32xf32>
    %91 = arith.divf %89, %90 : vector<2x32xf32>
    %92 = arith.mulf %83, %67 : vector<2x32xf32>
    %93 = arith.mulf %77, %85 : vector<2x32xf32>
    %94 = arith.addf %92, %93 : vector<2x32xf32>
    %95 = math.tanh %94 : vector<2x32xf32>
    %96 = arith.mulf %91, %95 : vector<2x32xf32>
    %cst_20 = arith.constant dense<0.000000e+00> : vector<2x128xf32>
    %97 = tpu.matmul %96, %15, %cst_20 {dimension_numbers = #tpu.dot_dimension_numbers<[1], [0], [0], [1], [0, 0, 1, 1], [], []>} : vector<2x32xf32>, vector<32x128xf32>, vector<2x128xf32> -> vector<2x128xf32>
    %98 = arith.addf %10, %97 : vector<2x128xf32>
    %99 = vector.extract_strided_slice %98 {offsets = [0, 0], sizes = [2, 32], strides = [1, 1]} : vector<2x128xf32> to vector<2x32xf32>
    %100 = arith.negf %99 : vector<2x32xf32>
    %101 = math.exp %100 : vector<2x32xf32>
    %cst_21 = arith.constant 1.000000e+00 : f32
    %102 = vector.broadcast %cst_21 : f32 to vector<2x32xf32>
    %103 = arith.addf %102, %101 : vector<2x32xf32>
    %104 = arith.divf %102, %103 : vector<2x32xf32>
    %105 = vector.extract_strided_slice %98 {offsets = [0, 32], sizes = [2, 32], strides = [1, 1]} : vector<2x128xf32> to vector<2x32xf32>
    %106 = arith.negf %105 : vector<2x32xf32>
    %107 = math.exp %106 : vector<2x32xf32>
    %cst_22 = arith.constant 1.000000e+00 : f32
    %108 = vector.broadcast %cst_22 : f32 to vector<2x32xf32>
    %109 = arith.addf %108, %107 : vector<2x32xf32>
    %110 = arith.divf %108, %109 : vector<2x32xf32>
    %111 = vector.extract_strided_slice %98 {offsets = [0, 64], sizes = [2, 32], strides = [1, 1]} : vector<2x128xf32> to vector<2x32xf32>
    %112 = math.tanh %111 : vector<2x32xf32>
    %113 = vector.extract_strided_slice %98 {offsets = [0, 96], sizes = [2, 32], strides = [1, 1]} : vector<2x128xf32> to vector<2x32xf32>
    %114 = arith.negf %113 : vector<2x32xf32>
    %115 = math.exp %114 : vector<2x32xf32>
    %cst_23 = arith.constant 1.000000e+00 : f32
    %116 = vector.broadcast %cst_23 : f32 to vector<2x32xf32>
    %117 = arith.addf %116, %115 : vector<2x32xf32>
    %118 = arith.divf %116, %117 : vector<2x32xf32>
    %119 = arith.mulf %110, %94 : vector<2x32xf32>
    %120 = arith.mulf %104, %112 : vector<2x32xf32>
    %121 = arith.addf %119, %120 : vector<2x32xf32>
    %122 = math.tanh %121 : vector<2x32xf32>
    %123 = arith.mulf %118, %122 : vector<2x32xf32>
    %cst_24 = arith.constant dense<0.000000e+00> : vector<2x128xf32>
    %124 = tpu.matmul %123, %15, %cst_24 {dimension_numbers = #tpu.dot_dimension_numbers<[1], [0], [0], [1], [0, 0, 1, 1], [], []>} : vector<2x32xf32>, vector<32x128xf32>, vector<2x128xf32> -> vector<2x128xf32>
    %125 = arith.addf %11, %124 : vector<2x128xf32>
    %126 = vector.extract_strided_slice %125 {offsets = [0, 0], sizes = [2, 32], strides = [1, 1]} : vector<2x128xf32> to vector<2x32xf32>
    %127 = arith.negf %126 : vector<2x32xf32>
    %128 = math.exp %127 : vector<2x32xf32>
    %cst_25 = arith.constant 1.000000e+00 : f32
    %129 = vector.broadcast %cst_25 : f32 to vector<2x32xf32>
    %130 = arith.addf %129, %128 : vector<2x32xf32>
    %131 = arith.divf %129, %130 : vector<2x32xf32>
    %132 = vector.extract_strided_slice %125 {offsets = [0, 32], sizes = [2, 32], strides = [1, 1]} : vector<2x128xf32> to vector<2x32xf32>
    %133 = arith.negf %132 : vector<2x32xf32>
    %134 = math.exp %133 : vector<2x32xf32>
    %cst_26 = arith.constant 1.000000e+00 : f32
    %135 = vector.broadcast %cst_26 : f32 to vector<2x32xf32>
    %136 = arith.addf %135, %134 : vector<2x32xf32>
    %137 = arith.divf %135, %136 : vector<2x32xf32>
    %138 = vector.extract_strided_slice %125 {offsets = [0, 64], sizes = [2, 32], strides = [1, 1]} : vector<2x128xf32> to vector<2x32xf32>
    %139 = math.tanh %138 : vector<2x32xf32>
    %140 = vector.extract_strided_slice %125 {offsets = [0, 96], sizes = [2, 32], strides = [1, 1]} : vector<2x128xf32> to vector<2x32xf32>
    %141 = arith.negf %140 : vector<2x32xf32>
    %142 = math.exp %141 : vector<2x32xf32>
    %cst_27 = arith.constant 1.000000e+00 : f32
    %143 = vector.broadcast %cst_27 : f32 to vector<2x32xf32>
    %144 = arith.addf %143, %142 : vector<2x32xf32>
    %145 = arith.divf %143, %144 : vector<2x32xf32>
    %146 = arith.mulf %137, %121 : vector<2x32xf32>
    %147 = arith.mulf %131, %139 : vector<2x32xf32>
    %148 = arith.addf %146, %147 : vector<2x32xf32>
    %149 = math.tanh %148 : vector<2x32xf32>
    %150 = arith.mulf %145, %149 : vector<2x32xf32>
    %cst_28 = arith.constant dense<0.000000e+00> : vector<2x128xf32>
    %151 = tpu.matmul %150, %15, %cst_28 {dimension_numbers = #tpu.dot_dimension_numbers<[1], [0], [0], [1], [0, 0, 1, 1], [], []>} : vector<2x32xf32>, vector<32x128xf32>, vector<2x128xf32> -> vector<2x128xf32>
    %152 = arith.addf %12, %151 : vector<2x128xf32>
    %153 = vector.extract_strided_slice %152 {offsets = [0, 0], sizes = [2, 32], strides = [1, 1]} : vector<2x128xf32> to vector<2x32xf32>
    %154 = arith.negf %153 : vector<2x32xf32>
    %155 = math.exp %154 : vector<2x32xf32>
    %cst_29 = arith.constant 1.000000e+00 : f32
    %156 = vector.broadcast %cst_29 : f32 to vector<2x32xf32>
    %157 = arith.addf %156, %155 : vector<2x32xf32>
    %158 = arith.divf %156, %157 : vector<2x32xf32>
    %159 = vector.extract_strided_slice %152 {offsets = [0, 32], sizes = [2, 32], strides = [1, 1]} : vector<2x128xf32> to vector<2x32xf32>
    %160 = arith.negf %159 : vector<2x32xf32>
    %161 = math.exp %160 : vector<2x32xf32>
    %cst_30 = arith.constant 1.000000e+00 : f32
    %162 = vector.broadcast %cst_30 : f32 to vector<2x32xf32>
    %163 = arith.addf %162, %161 : vector<2x32xf32>
    %164 = arith.divf %162, %163 : vector<2x32xf32>
    %165 = vector.extract_strided_slice %152 {offsets = [0, 64], sizes = [2, 32], strides = [1, 1]} : vector<2x128xf32> to vector<2x32xf32>
    %166 = math.tanh %165 : vector<2x32xf32>
    %167 = vector.extract_strided_slice %152 {offsets = [0, 96], sizes = [2, 32], strides = [1, 1]} : vector<2x128xf32> to vector<2x32xf32>
    %168 = arith.negf %167 : vector<2x32xf32>
    %169 = math.exp %168 : vector<2x32xf32>
    %cst_31 = arith.constant 1.000000e+00 : f32
    %170 = vector.broadcast %cst_31 : f32 to vector<2x32xf32>
    %171 = arith.addf %170, %169 : vector<2x32xf32>
    %172 = arith.divf %170, %171 : vector<2x32xf32>
    %173 = arith.mulf %164, %148 : vector<2x32xf32>
    %174 = arith.mulf %158, %166 : vector<2x32xf32>
    %175 = arith.addf %173, %174 : vector<2x32xf32>
    %176 = math.tanh %175 : vector<2x32xf32>
    %177 = arith.mulf %172, %176 : vector<2x32xf32>
    %cst_32 = arith.constant dense<0.000000e+00> : vector<2x128xf32>
    %178 = tpu.matmul %177, %15, %cst_32 {dimension_numbers = #tpu.dot_dimension_numbers<[1], [0], [0], [1], [0, 0, 1, 1], [], []>} : vector<2x32xf32>, vector<32x128xf32>, vector<2x128xf32> -> vector<2x128xf32>
    %179 = arith.addf %13, %178 : vector<2x128xf32>
    %180 = vector.extract_strided_slice %179 {offsets = [0, 0], sizes = [2, 32], strides = [1, 1]} : vector<2x128xf32> to vector<2x32xf32>
    %181 = arith.negf %180 : vector<2x32xf32>
    %182 = math.exp %181 : vector<2x32xf32>
    %cst_33 = arith.constant 1.000000e+00 : f32
    %183 = vector.broadcast %cst_33 : f32 to vector<2x32xf32>
    %184 = arith.addf %183, %182 : vector<2x32xf32>
    %185 = arith.divf %183, %184 : vector<2x32xf32>
    %186 = vector.extract_strided_slice %179 {offsets = [0, 32], sizes = [2, 32], strides = [1, 1]} : vector<2x128xf32> to vector<2x32xf32>
    %187 = arith.negf %186 : vector<2x32xf32>
    %188 = math.exp %187 : vector<2x32xf32>
    %cst_34 = arith.constant 1.000000e+00 : f32
    %189 = vector.broadcast %cst_34 : f32 to vector<2x32xf32>
    %190 = arith.addf %189, %188 : vector<2x32xf32>
    %191 = arith.divf %189, %190 : vector<2x32xf32>
    %192 = vector.extract_strided_slice %179 {offsets = [0, 64], sizes = [2, 32], strides = [1, 1]} : vector<2x128xf32> to vector<2x32xf32>
    %193 = math.tanh %192 : vector<2x32xf32>
    %194 = vector.extract_strided_slice %179 {offsets = [0, 96], sizes = [2, 32], strides = [1, 1]} : vector<2x128xf32> to vector<2x32xf32>
    %195 = arith.negf %194 : vector<2x32xf32>
    %196 = math.exp %195 : vector<2x32xf32>
    %cst_35 = arith.constant 1.000000e+00 : f32
    %197 = vector.broadcast %cst_35 : f32 to vector<2x32xf32>
    %198 = arith.addf %197, %196 : vector<2x32xf32>
    %199 = arith.divf %197, %198 : vector<2x32xf32>
    %200 = arith.mulf %191, %175 : vector<2x32xf32>
    %201 = arith.mulf %185, %193 : vector<2x32xf32>
    %202 = arith.addf %200, %201 : vector<2x32xf32>
    %203 = math.tanh %202 : vector<2x32xf32>
    %204 = arith.mulf %199, %203 : vector<2x32xf32>
    %cst_36 = arith.constant dense<0.000000e+00> : vector<2x128xf32>
    %205 = tpu.matmul %204, %15, %cst_36 {dimension_numbers = #tpu.dot_dimension_numbers<[1], [0], [0], [1], [0, 0, 1, 1], [], []>} : vector<2x32xf32>, vector<32x128xf32>, vector<2x128xf32> -> vector<2x128xf32>
    %206 = arith.addf %14, %205 : vector<2x128xf32>
    %207 = vector.extract_strided_slice %206 {offsets = [0, 0], sizes = [2, 32], strides = [1, 1]} : vector<2x128xf32> to vector<2x32xf32>
    %208 = arith.negf %207 : vector<2x32xf32>
    %209 = math.exp %208 : vector<2x32xf32>
    %cst_37 = arith.constant 1.000000e+00 : f32
    %210 = vector.broadcast %cst_37 : f32 to vector<2x32xf32>
    %211 = arith.addf %210, %209 : vector<2x32xf32>
    %212 = arith.divf %210, %211 : vector<2x32xf32>
    %213 = vector.extract_strided_slice %206 {offsets = [0, 32], sizes = [2, 32], strides = [1, 1]} : vector<2x128xf32> to vector<2x32xf32>
    %214 = arith.negf %213 : vector<2x32xf32>
    %215 = math.exp %214 : vector<2x32xf32>
    %cst_38 = arith.constant 1.000000e+00 : f32
    %216 = vector.broadcast %cst_38 : f32 to vector<2x32xf32>
    %217 = arith.addf %216, %215 : vector<2x32xf32>
    %218 = arith.divf %216, %217 : vector<2x32xf32>
    %219 = vector.extract_strided_slice %206 {offsets = [0, 64], sizes = [2, 32], strides = [1, 1]} : vector<2x128xf32> to vector<2x32xf32>
    %220 = math.tanh %219 : vector<2x32xf32>
    %221 = vector.extract_strided_slice %206 {offsets = [0, 96], sizes = [2, 32], strides = [1, 1]} : vector<2x128xf32> to vector<2x32xf32>
    %222 = arith.negf %221 : vector<2x32xf32>
    %223 = math.exp %222 : vector<2x32xf32>
    %cst_39 = arith.constant 1.000000e+00 : f32
    %224 = vector.broadcast %cst_39 : f32 to vector<2x32xf32>
    %225 = arith.addf %224, %223 : vector<2x32xf32>
    %226 = arith.divf %224, %225 : vector<2x32xf32>
    %227 = arith.mulf %218, %202 : vector<2x32xf32>
    %228 = arith.mulf %212, %220 : vector<2x32xf32>
    %229 = arith.addf %227, %228 : vector<2x32xf32>
    %230 = math.tanh %229 : vector<2x32xf32>
    %231 = arith.mulf %226, %230 : vector<2x32xf32>
    %232 = tpu.concatenate %42, %69, %96, %123, %150, %177, %204, %231 in 0 : vector<2x32xf32>, vector<2x32xf32>, vector<2x32xf32>, vector<2x32xf32>, vector<2x32xf32>, vector<2x32xf32>, vector<2x32xf32>, vector<2x32xf32> -> vector<16x32xf32>
    %c0_40 = arith.constant 0 : index
    %c0_41 = arith.constant 0 : index
    %233 = vector.load %arg4[%c0_40, %c0_41] : memref<32x128xf32, #tpu.memory_space<vmem>>, vector<32x128xf32>
    %cst_42 = arith.constant dense<0.000000e+00> : vector<16x128xf32>
    %234 = tpu.matmul %232, %233, %cst_42 {dimension_numbers = #tpu.dot_dimension_numbers<[1], [0], [0], [1], [0, 0, 1, 1], [], []>} : vector<16x32xf32>, vector<32x128xf32>, vector<16x128xf32> -> vector<16x128xf32>
    %c0_43 = arith.constant 0 : index
    %c0_44 = arith.constant 0 : index
    %235 = vector.load %arg6[%c0_43, %c0_44] : memref<1x128xf32, #tpu.memory_space<vmem>>, vector<1x128xf32>
    %236 = vector.broadcast %235 : vector<1x128xf32> to vector<16x128xf32>
    %237 = arith.addf %234, %236 : vector<16x128xf32>
    %238 = vector.extract_strided_slice %237 {offsets = [0, 0], sizes = [2, 128], strides = [1, 1]} : vector<16x128xf32> to vector<2x128xf32>
    %239 = vector.extract_strided_slice %237 {offsets = [2, 0], sizes = [2, 128], strides = [1, 1]} : vector<16x128xf32> to vector<2x128xf32>
    %240 = vector.extract_strided_slice %237 {offsets = [4, 0], sizes = [2, 128], strides = [1, 1]} : vector<16x128xf32> to vector<2x128xf32>
    %241 = vector.extract_strided_slice %237 {offsets = [6, 0], sizes = [2, 128], strides = [1, 1]} : vector<16x128xf32> to vector<2x128xf32>
    %242 = vector.extract_strided_slice %237 {offsets = [8, 0], sizes = [2, 128], strides = [1, 1]} : vector<16x128xf32> to vector<2x128xf32>
    %243 = vector.extract_strided_slice %237 {offsets = [10, 0], sizes = [2, 128], strides = [1, 1]} : vector<16x128xf32> to vector<2x128xf32>
    %244 = vector.extract_strided_slice %237 {offsets = [12, 0], sizes = [2, 128], strides = [1, 1]} : vector<16x128xf32> to vector<2x128xf32>
    %245 = vector.extract_strided_slice %237 {offsets = [14, 0], sizes = [2, 128], strides = [1, 1]} : vector<16x128xf32> to vector<2x128xf32>
    %c0_45 = arith.constant 0 : index
    %c0_46 = arith.constant 0 : index
    %246 = vector.load %arg5[%c0_45, %c0_46] : memref<32x128xf32, #tpu.memory_space<vmem>>, vector<32x128xf32>
    %cst_47 = arith.constant dense<0.000000e+00> : vector<2x128xf32>
    %247 = tpu.matmul %0, %246, %cst_47 {dimension_numbers = #tpu.dot_dimension_numbers<[1], [0], [0], [1], [0, 0, 1, 1], [], []>} : vector<2x32xf32>, vector<32x128xf32>, vector<2x128xf32> -> vector<2x128xf32>
    %248 = arith.addf %238, %247 : vector<2x128xf32>
    %249 = vector.extract_strided_slice %248 {offsets = [0, 0], sizes = [2, 32], strides = [1, 1]} : vector<2x128xf32> to vector<2x32xf32>
    %250 = arith.negf %249 : vector<2x32xf32>
    %251 = math.exp %250 : vector<2x32xf32>
    %cst_48 = arith.constant 1.000000e+00 : f32
    %252 = vector.broadcast %cst_48 : f32 to vector<2x32xf32>
    %253 = arith.addf %252, %251 : vector<2x32xf32>
    %254 = arith.divf %252, %253 : vector<2x32xf32>
    %255 = vector.extract_strided_slice %248 {offsets = [0, 32], sizes = [2, 32], strides = [1, 1]} : vector<2x128xf32> to vector<2x32xf32>
    %256 = arith.negf %255 : vector<2x32xf32>
    %257 = math.exp %256 : vector<2x32xf32>
    %cst_49 = arith.constant 1.000000e+00 : f32
    %258 = vector.broadcast %cst_49 : f32 to vector<2x32xf32>
    %259 = arith.addf %258, %257 : vector<2x32xf32>
    %260 = arith.divf %258, %259 : vector<2x32xf32>
    %261 = vector.extract_strided_slice %248 {offsets = [0, 64], sizes = [2, 32], strides = [1, 1]} : vector<2x128xf32> to vector<2x32xf32>
    %262 = math.tanh %261 : vector<2x32xf32>
    %263 = vector.extract_strided_slice %248 {offsets = [0, 96], sizes = [2, 32], strides = [1, 1]} : vector<2x128xf32> to vector<2x32xf32>
    %264 = arith.negf %263 : vector<2x32xf32>
    %265 = math.exp %264 : vector<2x32xf32>
    %cst_50 = arith.constant 1.000000e+00 : f32
    %266 = vector.broadcast %cst_50 : f32 to vector<2x32xf32>
    %267 = arith.addf %266, %265 : vector<2x32xf32>
    %268 = arith.divf %266, %267 : vector<2x32xf32>
    %269 = arith.mulf %260, %0 : vector<2x32xf32>
    %270 = arith.mulf %254, %262 : vector<2x32xf32>
    %271 = arith.addf %269, %270 : vector<2x32xf32>
    %272 = math.tanh %271 : vector<2x32xf32>
    %273 = arith.mulf %268, %272 : vector<2x32xf32>
    %cst_51 = arith.constant dense<0.000000e+00> : vector<2x128xf32>
    %274 = tpu.matmul %273, %246, %cst_51 {dimension_numbers = #tpu.dot_dimension_numbers<[1], [0], [0], [1], [0, 0, 1, 1], [], []>} : vector<2x32xf32>, vector<32x128xf32>, vector<2x128xf32> -> vector<2x128xf32>
    %275 = arith.addf %239, %274 : vector<2x128xf32>
    %276 = vector.extract_strided_slice %275 {offsets = [0, 0], sizes = [2, 32], strides = [1, 1]} : vector<2x128xf32> to vector<2x32xf32>
    %277 = arith.negf %276 : vector<2x32xf32>
    %278 = math.exp %277 : vector<2x32xf32>
    %cst_52 = arith.constant 1.000000e+00 : f32
    %279 = vector.broadcast %cst_52 : f32 to vector<2x32xf32>
    %280 = arith.addf %279, %278 : vector<2x32xf32>
    %281 = arith.divf %279, %280 : vector<2x32xf32>
    %282 = vector.extract_strided_slice %275 {offsets = [0, 32], sizes = [2, 32], strides = [1, 1]} : vector<2x128xf32> to vector<2x32xf32>
    %283 = arith.negf %282 : vector<2x32xf32>
    %284 = math.exp %283 : vector<2x32xf32>
    %cst_53 = arith.constant 1.000000e+00 : f32
    %285 = vector.broadcast %cst_53 : f32 to vector<2x32xf32>
    %286 = arith.addf %285, %284 : vector<2x32xf32>
    %287 = arith.divf %285, %286 : vector<2x32xf32>
    %288 = vector.extract_strided_slice %275 {offsets = [0, 64], sizes = [2, 32], strides = [1, 1]} : vector<2x128xf32> to vector<2x32xf32>
    %289 = math.tanh %288 : vector<2x32xf32>
    %290 = vector.extract_strided_slice %275 {offsets = [0, 96], sizes = [2, 32], strides = [1, 1]} : vector<2x128xf32> to vector<2x32xf32>
    %291 = arith.negf %290 : vector<2x32xf32>
    %292 = math.exp %291 : vector<2x32xf32>
    %cst_54 = arith.constant 1.000000e+00 : f32
    %293 = vector.broadcast %cst_54 : f32 to vector<2x32xf32>
    %294 = arith.addf %293, %292 : vector<2x32xf32>
    %295 = arith.divf %293, %294 : vector<2x32xf32>
    %296 = arith.mulf %287, %271 : vector<2x32xf32>
    %297 = arith.mulf %281, %289 : vector<2x32xf32>
    %298 = arith.addf %296, %297 : vector<2x32xf32>
    %299 = math.tanh %298 : vector<2x32xf32>
    %300 = arith.mulf %295, %299 : vector<2x32xf32>
    %cst_55 = arith.constant dense<0.000000e+00> : vector<2x128xf32>
    %301 = tpu.matmul %300, %246, %cst_55 {dimension_numbers = #tpu.dot_dimension_numbers<[1], [0], [0], [1], [0, 0, 1, 1], [], []>} : vector<2x32xf32>, vector<32x128xf32>, vector<2x128xf32> -> vector<2x128xf32>
    %302 = arith.addf %240, %301 : vector<2x128xf32>
    %303 = vector.extract_strided_slice %302 {offsets = [0, 0], sizes = [2, 32], strides = [1, 1]} : vector<2x128xf32> to vector<2x32xf32>
    %304 = arith.negf %303 : vector<2x32xf32>
    %305 = math.exp %304 : vector<2x32xf32>
    %cst_56 = arith.constant 1.000000e+00 : f32
    %306 = vector.broadcast %cst_56 : f32 to vector<2x32xf32>
    %307 = arith.addf %306, %305 : vector<2x32xf32>
    %308 = arith.divf %306, %307 : vector<2x32xf32>
    %309 = vector.extract_strided_slice %302 {offsets = [0, 32], sizes = [2, 32], strides = [1, 1]} : vector<2x128xf32> to vector<2x32xf32>
    %310 = arith.negf %309 : vector<2x32xf32>
    %311 = math.exp %310 : vector<2x32xf32>
    %cst_57 = arith.constant 1.000000e+00 : f32
    %312 = vector.broadcast %cst_57 : f32 to vector<2x32xf32>
    %313 = arith.addf %312, %311 : vector<2x32xf32>
    %314 = arith.divf %312, %313 : vector<2x32xf32>
    %315 = vector.extract_strided_slice %302 {offsets = [0, 64], sizes = [2, 32], strides = [1, 1]} : vector<2x128xf32> to vector<2x32xf32>
    %316 = math.tanh %315 : vector<2x32xf32>
    %317 = vector.extract_strided_slice %302 {offsets = [0, 96], sizes = [2, 32], strides = [1, 1]} : vector<2x128xf32> to vector<2x32xf32>
    %318 = arith.negf %317 : vector<2x32xf32>
    %319 = math.exp %318 : vector<2x32xf32>
    %cst_58 = arith.constant 1.000000e+00 : f32
    %320 = vector.broadcast %cst_58 : f32 to vector<2x32xf32>
    %321 = arith.addf %320, %319 : vector<2x32xf32>
    %322 = arith.divf %320, %321 : vector<2x32xf32>
    %323 = arith.mulf %314, %298 : vector<2x32xf32>
    %324 = arith.mulf %308, %316 : vector<2x32xf32>
    %325 = arith.addf %323, %324 : vector<2x32xf32>
    %326 = math.tanh %325 : vector<2x32xf32>
    %327 = arith.mulf %322, %326 : vector<2x32xf32>
    %cst_59 = arith.constant dense<0.000000e+00> : vector<2x128xf32>
    %328 = tpu.matmul %327, %246, %cst_59 {dimension_numbers = #tpu.dot_dimension_numbers<[1], [0], [0], [1], [0, 0, 1, 1], [], []>} : vector<2x32xf32>, vector<32x128xf32>, vector<2x128xf32> -> vector<2x128xf32>
    %329 = arith.addf %241, %328 : vector<2x128xf32>
    %330 = vector.extract_strided_slice %329 {offsets = [0, 0], sizes = [2, 32], strides = [1, 1]} : vector<2x128xf32> to vector<2x32xf32>
    %331 = arith.negf %330 : vector<2x32xf32>
    %332 = math.exp %331 : vector<2x32xf32>
    %cst_60 = arith.constant 1.000000e+00 : f32
    %333 = vector.broadcast %cst_60 : f32 to vector<2x32xf32>
    %334 = arith.addf %333, %332 : vector<2x32xf32>
    %335 = arith.divf %333, %334 : vector<2x32xf32>
    %336 = vector.extract_strided_slice %329 {offsets = [0, 32], sizes = [2, 32], strides = [1, 1]} : vector<2x128xf32> to vector<2x32xf32>
    %337 = arith.negf %336 : vector<2x32xf32>
    %338 = math.exp %337 : vector<2x32xf32>
    %cst_61 = arith.constant 1.000000e+00 : f32
    %339 = vector.broadcast %cst_61 : f32 to vector<2x32xf32>
    %340 = arith.addf %339, %338 : vector<2x32xf32>
    %341 = arith.divf %339, %340 : vector<2x32xf32>
    %342 = vector.extract_strided_slice %329 {offsets = [0, 64], sizes = [2, 32], strides = [1, 1]} : vector<2x128xf32> to vector<2x32xf32>
    %343 = math.tanh %342 : vector<2x32xf32>
    %344 = vector.extract_strided_slice %329 {offsets = [0, 96], sizes = [2, 32], strides = [1, 1]} : vector<2x128xf32> to vector<2x32xf32>
    %345 = arith.negf %344 : vector<2x32xf32>
    %346 = math.exp %345 : vector<2x32xf32>
    %cst_62 = arith.constant 1.000000e+00 : f32
    %347 = vector.broadcast %cst_62 : f32 to vector<2x32xf32>
    %348 = arith.addf %347, %346 : vector<2x32xf32>
    %349 = arith.divf %347, %348 : vector<2x32xf32>
    %350 = arith.mulf %341, %325 : vector<2x32xf32>
    %351 = arith.mulf %335, %343 : vector<2x32xf32>
    %352 = arith.addf %350, %351 : vector<2x32xf32>
    %353 = math.tanh %352 : vector<2x32xf32>
    %354 = arith.mulf %349, %353 : vector<2x32xf32>
    %cst_63 = arith.constant dense<0.000000e+00> : vector<2x128xf32>
    %355 = tpu.matmul %354, %246, %cst_63 {dimension_numbers = #tpu.dot_dimension_numbers<[1], [0], [0], [1], [0, 0, 1, 1], [], []>} : vector<2x32xf32>, vector<32x128xf32>, vector<2x128xf32> -> vector<2x128xf32>
    %356 = arith.addf %242, %355 : vector<2x128xf32>
    %357 = vector.extract_strided_slice %356 {offsets = [0, 0], sizes = [2, 32], strides = [1, 1]} : vector<2x128xf32> to vector<2x32xf32>
    %358 = arith.negf %357 : vector<2x32xf32>
    %359 = math.exp %358 : vector<2x32xf32>
    %cst_64 = arith.constant 1.000000e+00 : f32
    %360 = vector.broadcast %cst_64 : f32 to vector<2x32xf32>
    %361 = arith.addf %360, %359 : vector<2x32xf32>
    %362 = arith.divf %360, %361 : vector<2x32xf32>
    %363 = vector.extract_strided_slice %356 {offsets = [0, 32], sizes = [2, 32], strides = [1, 1]} : vector<2x128xf32> to vector<2x32xf32>
    %364 = arith.negf %363 : vector<2x32xf32>
    %365 = math.exp %364 : vector<2x32xf32>
    %cst_65 = arith.constant 1.000000e+00 : f32
    %366 = vector.broadcast %cst_65 : f32 to vector<2x32xf32>
    %367 = arith.addf %366, %365 : vector<2x32xf32>
    %368 = arith.divf %366, %367 : vector<2x32xf32>
    %369 = vector.extract_strided_slice %356 {offsets = [0, 64], sizes = [2, 32], strides = [1, 1]} : vector<2x128xf32> to vector<2x32xf32>
    %370 = math.tanh %369 : vector<2x32xf32>
    %371 = vector.extract_strided_slice %356 {offsets = [0, 96], sizes = [2, 32], strides = [1, 1]} : vector<2x128xf32> to vector<2x32xf32>
    %372 = arith.negf %371 : vector<2x32xf32>
    %373 = math.exp %372 : vector<2x32xf32>
    %cst_66 = arith.constant 1.000000e+00 : f32
    %374 = vector.broadcast %cst_66 : f32 to vector<2x32xf32>
    %375 = arith.addf %374, %373 : vector<2x32xf32>
    %376 = arith.divf %374, %375 : vector<2x32xf32>
    %377 = arith.mulf %368, %352 : vector<2x32xf32>
    %378 = arith.mulf %362, %370 : vector<2x32xf32>
    %379 = arith.addf %377, %378 : vector<2x32xf32>
    %380 = math.tanh %379 : vector<2x32xf32>
    %381 = arith.mulf %376, %380 : vector<2x32xf32>
    %cst_67 = arith.constant dense<0.000000e+00> : vector<2x128xf32>
    %382 = tpu.matmul %381, %246, %cst_67 {dimension_numbers = #tpu.dot_dimension_numbers<[1], [0], [0], [1], [0, 0, 1, 1], [], []>} : vector<2x32xf32>, vector<32x128xf32>, vector<2x128xf32> -> vector<2x128xf32>
    %383 = arith.addf %243, %382 : vector<2x128xf32>
    %384 = vector.extract_strided_slice %383 {offsets = [0, 0], sizes = [2, 32], strides = [1, 1]} : vector<2x128xf32> to vector<2x32xf32>
    %385 = arith.negf %384 : vector<2x32xf32>
    %386 = math.exp %385 : vector<2x32xf32>
    %cst_68 = arith.constant 1.000000e+00 : f32
    %387 = vector.broadcast %cst_68 : f32 to vector<2x32xf32>
    %388 = arith.addf %387, %386 : vector<2x32xf32>
    %389 = arith.divf %387, %388 : vector<2x32xf32>
    %390 = vector.extract_strided_slice %383 {offsets = [0, 32], sizes = [2, 32], strides = [1, 1]} : vector<2x128xf32> to vector<2x32xf32>
    %391 = arith.negf %390 : vector<2x32xf32>
    %392 = math.exp %391 : vector<2x32xf32>
    %cst_69 = arith.constant 1.000000e+00 : f32
    %393 = vector.broadcast %cst_69 : f32 to vector<2x32xf32>
    %394 = arith.addf %393, %392 : vector<2x32xf32>
    %395 = arith.divf %393, %394 : vector<2x32xf32>
    %396 = vector.extract_strided_slice %383 {offsets = [0, 64], sizes = [2, 32], strides = [1, 1]} : vector<2x128xf32> to vector<2x32xf32>
    %397 = math.tanh %396 : vector<2x32xf32>
    %398 = vector.extract_strided_slice %383 {offsets = [0, 96], sizes = [2, 32], strides = [1, 1]} : vector<2x128xf32> to vector<2x32xf32>
    %399 = arith.negf %398 : vector<2x32xf32>
    %400 = math.exp %399 : vector<2x32xf32>
    %cst_70 = arith.constant 1.000000e+00 : f32
    %401 = vector.broadcast %cst_70 : f32 to vector<2x32xf32>
    %402 = arith.addf %401, %400 : vector<2x32xf32>
    %403 = arith.divf %401, %402 : vector<2x32xf32>
    %404 = arith.mulf %395, %379 : vector<2x32xf32>
    %405 = arith.mulf %389, %397 : vector<2x32xf32>
    %406 = arith.addf %404, %405 : vector<2x32xf32>
    %407 = math.tanh %406 : vector<2x32xf32>
    %408 = arith.mulf %403, %407 : vector<2x32xf32>
    %cst_71 = arith.constant dense<0.000000e+00> : vector<2x128xf32>
    %409 = tpu.matmul %408, %246, %cst_71 {dimension_numbers = #tpu.dot_dimension_numbers<[1], [0], [0], [1], [0, 0, 1, 1], [], []>} : vector<2x32xf32>, vector<32x128xf32>, vector<2x128xf32> -> vector<2x128xf32>
    %410 = arith.addf %244, %409 : vector<2x128xf32>
    %411 = vector.extract_strided_slice %410 {offsets = [0, 0], sizes = [2, 32], strides = [1, 1]} : vector<2x128xf32> to vector<2x32xf32>
    %412 = arith.negf %411 : vector<2x32xf32>
    %413 = math.exp %412 : vector<2x32xf32>
    %cst_72 = arith.constant 1.000000e+00 : f32
    %414 = vector.broadcast %cst_72 : f32 to vector<2x32xf32>
    %415 = arith.addf %414, %413 : vector<2x32xf32>
    %416 = arith.divf %414, %415 : vector<2x32xf32>
    %417 = vector.extract_strided_slice %410 {offsets = [0, 32], sizes = [2, 32], strides = [1, 1]} : vector<2x128xf32> to vector<2x32xf32>
    %418 = arith.negf %417 : vector<2x32xf32>
    %419 = math.exp %418 : vector<2x32xf32>
    %cst_73 = arith.constant 1.000000e+00 : f32
    %420 = vector.broadcast %cst_73 : f32 to vector<2x32xf32>
    %421 = arith.addf %420, %419 : vector<2x32xf32>
    %422 = arith.divf %420, %421 : vector<2x32xf32>
    %423 = vector.extract_strided_slice %410 {offsets = [0, 64], sizes = [2, 32], strides = [1, 1]} : vector<2x128xf32> to vector<2x32xf32>
    %424 = math.tanh %423 : vector<2x32xf32>
    %425 = vector.extract_strided_slice %410 {offsets = [0, 96], sizes = [2, 32], strides = [1, 1]} : vector<2x128xf32> to vector<2x32xf32>
    %426 = arith.negf %425 : vector<2x32xf32>
    %427 = math.exp %426 : vector<2x32xf32>
    %cst_74 = arith.constant 1.000000e+00 : f32
    %428 = vector.broadcast %cst_74 : f32 to vector<2x32xf32>
    %429 = arith.addf %428, %427 : vector<2x32xf32>
    %430 = arith.divf %428, %429 : vector<2x32xf32>
    %431 = arith.mulf %422, %406 : vector<2x32xf32>
    %432 = arith.mulf %416, %424 : vector<2x32xf32>
    %433 = arith.addf %431, %432 : vector<2x32xf32>
    %434 = math.tanh %433 : vector<2x32xf32>
    %435 = arith.mulf %430, %434 : vector<2x32xf32>
    %cst_75 = arith.constant dense<0.000000e+00> : vector<2x128xf32>
    %436 = tpu.matmul %435, %246, %cst_75 {dimension_numbers = #tpu.dot_dimension_numbers<[1], [0], [0], [1], [0, 0, 1, 1], [], []>} : vector<2x32xf32>, vector<32x128xf32>, vector<2x128xf32> -> vector<2x128xf32>
    %437 = arith.addf %245, %436 : vector<2x128xf32>
    %438 = vector.extract_strided_slice %437 {offsets = [0, 0], sizes = [2, 32], strides = [1, 1]} : vector<2x128xf32> to vector<2x32xf32>
    %439 = arith.negf %438 : vector<2x32xf32>
    %440 = math.exp %439 : vector<2x32xf32>
    %cst_76 = arith.constant 1.000000e+00 : f32
    %441 = vector.broadcast %cst_76 : f32 to vector<2x32xf32>
    %442 = arith.addf %441, %440 : vector<2x32xf32>
    %443 = arith.divf %441, %442 : vector<2x32xf32>
    %444 = vector.extract_strided_slice %437 {offsets = [0, 32], sizes = [2, 32], strides = [1, 1]} : vector<2x128xf32> to vector<2x32xf32>
    %445 = arith.negf %444 : vector<2x32xf32>
    %446 = math.exp %445 : vector<2x32xf32>
    %cst_77 = arith.constant 1.000000e+00 : f32
    %447 = vector.broadcast %cst_77 : f32 to vector<2x32xf32>
    %448 = arith.addf %447, %446 : vector<2x32xf32>
    %449 = arith.divf %447, %448 : vector<2x32xf32>
    %450 = vector.extract_strided_slice %437 {offsets = [0, 64], sizes = [2, 32], strides = [1, 1]} : vector<2x128xf32> to vector<2x32xf32>
    %451 = math.tanh %450 : vector<2x32xf32>
    %452 = vector.extract_strided_slice %437 {offsets = [0, 96], sizes = [2, 32], strides = [1, 1]} : vector<2x128xf32> to vector<2x32xf32>
    %453 = arith.negf %452 : vector<2x32xf32>
    %454 = math.exp %453 : vector<2x32xf32>
    %cst_78 = arith.constant 1.000000e+00 : f32
    %455 = vector.broadcast %cst_78 : f32 to vector<2x32xf32>
    %456 = arith.addf %455, %454 : vector<2x32xf32>
    %457 = arith.divf %455, %456 : vector<2x32xf32>
    %458 = arith.mulf %449, %433 : vector<2x32xf32>
    %459 = arith.mulf %443, %451 : vector<2x32xf32>
    %460 = arith.addf %458, %459 : vector<2x32xf32>
    %461 = math.tanh %460 : vector<2x32xf32>
    %462 = arith.mulf %457, %461 : vector<2x32xf32>
    %c0_79 = arith.constant 0 : index
    %c0_80 = arith.constant 0 : index
    %463 = vector.load %arg7[%c0_79, %c0_80] : memref<32x4xf32, #tpu.memory_space<vmem>>, vector<32x4xf32>
    %cst_81 = arith.constant dense<0.000000e+00> : vector<2x4xf32>
    %464 = tpu.matmul %462, %463, %cst_81 {dimension_numbers = #tpu.dot_dimension_numbers<[1], [0], [0], [1], [0, 0, 1, 1], [], []>} : vector<2x32xf32>, vector<32x4xf32>, vector<2x4xf32> -> vector<2x4xf32>
    %c0_82 = arith.constant 0 : index
    %c0_83 = arith.constant 0 : index
    %465 = vector.load %arg8[%c0_82, %c0_83] : memref<1x4xf32, #tpu.memory_space<vmem>>, vector<1x4xf32>
    %466 = vector.broadcast %465 : vector<1x4xf32> to vector<2x4xf32>
    %467 = arith.addf %464, %466 : vector<2x4xf32>
    %c0_84 = arith.constant 0 : index
    %c0_85 = arith.constant 0 : index
    %468 = vector.load %arg9[%c0_84, %c0_85] : memref<2x4xf32, #tpu.memory_space<vmem>>, vector<2x4xf32>
    tpu.vector_store %arg9[%c0_84, %c0_85], %467 {strides = array<i32>} : memref<2x4xf32, #tpu.memory_space<vmem>>, vector<2x4xf32>,
    return
  }
}

</mosaic_0001>

<llo_original>
// kernel: tpu_custom_call.1
$region0: #{tpu_custom_call.1}
  #allocation0 [shape = 'u32[]', space=smem, size = 0x4, offset = 0x4, fixed_abs, tag = 'smem constant byte address 0x4 - core index']
  #allocation1 [shape = 'u32[144,128]{1,0:T(1,128)}', space=vmem, size = 0x12000, scoped, tag = 'internal scratch']
  %s0 = inlined_call_operand.vmem [shape: f32[16,4], index: 0, kind: input, shape index: {}]
  %s1 = inlined_call_operand.hbm [shape: f32[4,128], index: 1, kind: input, shape index: {}]
  %s2 = inlined_call_operand.vmem [shape: f32[32,128], index: 2, kind: input, shape index: {}]
  %s3 = inlined_call_operand.vmem [shape: f32[1,128], index: 3, kind: input, shape index: {}]
  %s4 = inlined_call_operand.vmem [shape: f32[32,128], index: 4, kind: input, shape index: {}]
  %s5 = inlined_call_operand.hbm [shape: f32[32,128], index: 5, kind: input, shape index: {}]
  %s6 = inlined_call_operand.vmem [shape: f32[1,128], index: 6, kind: input, shape index: {}]
  %s7 = inlined_call_operand.vmem [shape: f32[32,4], index: 7, kind: input, shape index: {}]
  %s8 = inlined_call_operand.vmem [shape: f32[1,4], index: 8, kind: input, shape index: {}]
  %s9 = inlined_call_operand.hbm [shape: f32[2,4], index: 9, kind: output, shape index: {}]
  %s10 = sld [smem:[#allocation0]]
  $region54: #{tpu_custom_call.1} parent=0
    _
  %s12 = ssub.s32 1, %s10
  %s13 = scalar_select 0, %s12, %s10
  $region1: #{tpu_custom_call.1} parent=0
    #allocation2 [shape = 'u8[2048]{0}', space=vmem, size = 0x800, scoped, tag = 'input window, operand 1, single buffered']
    #allocation3 [shape = 's32[1]{0}', space=sflag, size = 0x4, scoped, tag = 'scoped memory for tpu_custom_call.1']
    #allocation4 [shape = 's32[1]{0}', space=sflag, size = 0x4, scoped, tag = 'scoped memory for tpu_custom_call.1']
    #allocation5 [shape = 'u8[16384]{0}', space=vmem, size = 0x4000, scoped, tag = 'input window, operand 5, single buffered']
    #allocation6 [shape = 's32[1]{0}', space=sflag, size = 0x4, scoped, tag = 'scoped memory for tpu_custom_call.1']
    #allocation7 [shape = 'u8[1024]{0}', space=vmem, size = 0x400, scoped, tag = 'output window, operand 0, single buffered']
    %14 = vsyncpa [#allocation3], 0
    %15 = vsyncpa [#allocation6], 0
    %16 = vsyncpa [#allocation4], 0
    // Predicated region
    $region2: #{tpu_custom_call.1} parent=1 // pred_check
      _
    $region3: #{tpu_custom_call.1} parent=1 // pred_check_branch
      %18 = sbr.rel (0) target = $region5
    $region4: #{tpu_custom_call.1} parent=1 // pred_region
      _
    $region5: #{tpu_custom_call.1} parent=1 // pred_fallthru
      _
    // Predicated region
    $region6: #{tpu_custom_call.1} parent=1 // pred_check
      _
    $region7: #{tpu_custom_call.1} parent=1 // pred_check_branch
      %20 = sbr.rel (0) target = $region9
    $region8: #{tpu_custom_call.1} parent=1 // pred_region
      %s22 = ssub.s32 64, 64
      %23 = vsyncadd [#allocation3], %s22
      %s25 = sshll.u32 [#allocation2], 4
      %s26 = int_to_ptr.vmem [resolvable:$true] %s25
      %28 = dma.hbm_to_vmem [thread:$0]  %s1, 64, %s26, [#allocation3]
    $region9: #{tpu_custom_call.1} parent=1 // pred_fallthru
      _
    // Predicated region
    $region10: #{tpu_custom_call.1} parent=1 // pred_check
      _
    $region11: #{tpu_custom_call.1} parent=1 // pred_check_branch
      %30 = sbr.rel (0) target = $region13
    $region12: #{tpu_custom_call.1} parent=1 // pred_region
      _
    $region13: #{tpu_custom_call.1} parent=1 // pred_fallthru
      _
    // Predicated region
    $region14: #{tpu_custom_call.1} parent=1 // pred_check
      _
    $region15: #{tpu_custom_call.1} parent=1 // pred_check_branch
      %32 = sbr.rel (0) target = $region17
    $region16: #{tpu_custom_call.1} parent=1 // pred_region
      _
    $region17: #{tpu_custom_call.1} parent=1 // pred_fallthru
      _
    // Predicated region
    $region18: #{tpu_custom_call.1} parent=1 // pred_check
      _
    $region19: #{tpu_custom_call.1} parent=1 // pred_check_branch
      %34 = sbr.rel (0) target = $region21
    $region20: #{tpu_custom_call.1} parent=1 // pred_region
      _
    $region21: #{tpu_custom_call.1} parent=1 // pred_fallthru
      _
    // Predicated region
    $region22: #{tpu_custom_call.1} parent=1 // pred_check
      _
    $region23: #{tpu_custom_call.1} parent=1 // pred_check_branch
      %36 = sbr.rel (0) target = $region25
    $region24: #{tpu_custom_call.1} parent=1 // pred_region
      %s38 = ssub.s32 512, 512
      %39 = vsyncadd [#allocation6], %s38
      %s40 = sshll.u32 [#allocation5], 4
      %s41 = int_to_ptr.vmem [resolvable:$true] %s40
      %46 = dma.hbm_to_vmem [thread:$0]  %s5, 512, %s41, [#allocation6], 128, 128, 8
    $region25: #{tpu_custom_call.1} parent=1 // pred_fallthru
      _
    // Predicated region
    $region26: #{tpu_custom_call.1} parent=1 // pred_check
      _
    $region27: #{tpu_custom_call.1} parent=1 // pred_check_branch
      %48 = sbr.rel (0) target = $region29
    $region28: #{tpu_custom_call.1} parent=1 // pred_region
      _
    $region29: #{tpu_custom_call.1} parent=1 // pred_fallthru
      _
    // Predicated region
    $region30: #{tpu_custom_call.1} parent=1 // pred_check
      _
    $region31: #{tpu_custom_call.1} parent=1 // pred_check_branch
      %50 = sbr.rel (0) target = $region33
    $region32: #{tpu_custom_call.1} parent=1 // pred_region
      _
    $region33: #{tpu_custom_call.1} parent=1 // pred_fallthru
      _
    // Predicated region
    $region34: #{tpu_custom_call.1} parent=1 // pred_check
      _
    $region35: #{tpu_custom_call.1} parent=1 // pred_check_branch
      %52 = sbr.rel (0) target = $region37
    $region36: #{tpu_custom_call.1} parent=1 // pred_region
      _
    $region37: #{tpu_custom_call.1} parent=1 // pred_fallthru
      _
    // Predicated region
    $region38: #{tpu_custom_call.1} parent=1 // pred_check
      _
    $region39: #{tpu_custom_call.1} parent=1 // pred_check_branch
      %54 = sbr.rel (0) target = $region41
    $region40: #{tpu_custom_call.1} parent=1 // pred_region
      %55 = dma.done [#allocation3], 64
    $region41: #{tpu_custom_call.1} parent=1 // pred_fallthru
      _
    // Predicated region
    $region42: #{tpu_custom_call.1} parent=1 // pred_check
      _
    $region43: #{tpu_custom_call.1} parent=1 // pred_check_branch
      %57 = sbr.rel (0) target = $region45
    $region44: #{tpu_custom_call.1} parent=1 // pred_region
      %58 = dma.done [#allocation6], 512
    $region45: #{tpu_custom_call.1} parent=1 // pred_fallthru
      _
    %v59 = vld [vmem:[%s0] sm:$0xff]
    %v60 = vld [vmem:[%s0 + $0x8] sm:$0xff]
    %v61 = vld [vmem:[#allocation2] sm:$0xf]
    %v62 = vld [vmem:[%s3] sm:$0x1]
    %v64 = vlaneseq
    %v65 = vshrl.u32 %v64, 7
    %v66 = vsub.s32 0, %v65
    %v67 = vrot.slane %v62, %v66
    %vm69 = vcmask 31744
    %v71 = vsel %vm69, %v59, 0
    %v74 = vsel %vm69, %v60, 0
    %vm76 = vcmask 1043456
    %v78 = vsel %vm76, %v61, 0
    %80 = vmatprep.subr.mxu0 0.0
    %81 = vmatpush1.msra.mxu0 %v78
    %82 = vmatprep.subr.mxu0 0.0
    %83 = vmatpush1.msra.mxu0 0.0
    %84 = vmatprep.subr.mxu0 0.0
    %85 = vmatpush1.msra.mxu0 0.0
    %86 = vmatprep.subr.mxu0 0.0
    %87 = vmatpush1.msra.mxu0 0.0
    %88 = vmatprep.subr.mxu0 0.0
    %89 = vmatpush1.msra.mxu0 0.0
    %90 = vmatprep.subr.mxu0 0.0
    %91 = vmatpush1.msra.mxu0 0.0
    %92 = vmatprep.subr.mxu0 0.0
    %93 = vmatpush1.msra.mxu0 0.0
    %94 = vmatprep.subr.mxu0 0.0
    %95 = vmatpush1.msra.mxu0 0.0
    %96 = vmatprep.subr.mxu0 0.0
    %97 = vmatpush1.msra.mxu0 0.0
    %98 = vmatprep.subr.mxu0 0.0
    %99 = vmatpush1.msra.mxu0 0.0
    %100 = vmatprep.subr.mxu0 0.0
    %101 = vmatpush1.msra.mxu0 0.0
    %102 = vmatprep.subr.mxu0 0.0
    %103 = vmatpush1.msra.mxu0 0.0
    %104 = vmatprep.subr.mxu0 0.0
    %105 = vmatpush1.msra.mxu0 0.0
    %106 = vmatprep.subr.mxu0 0.0
    %107 = vmatpush1.msra.mxu0 0.0
    %108 = vmatprep.subr.mxu0 0.0
    %109 = vmatpush1.msra.mxu0 0.0
    %110 = vmatprep.subr.mxu0 0.0
    %111 = vmatpush1.msra.mxu0 0.0
    %112 = vmatprep.subr.mxu0 0.0
    %113 = vmatpush1.msra.mxu0 0.0
    %114 = vmatprep.subr.mxu0 0.0
    %115 = vmatpush1.msra.mxu0 0.0
    %116 = vmatprep.subr.mxu0 0.0
    %117 = vmatpush1.msra.mxu0 0.0
    %118 = vmatprep.subr.mxu0 0.0
    %119 = vmatpush1.msra.mxu0 0.0
    %120 = vmatprep.subr.mxu0 0.0
    %121 = vmatpush1.msra.mxu0 0.0
    %122 = vmatprep.subr.mxu0 0.0
    %123 = vmatpush1.msra.mxu0 0.0
    %124 = vmatprep.subr.mxu0 0.0
    %125 = vmatpush1.msra.mxu0 0.0
    %126 = vmatprep.subr.mxu0 0.0
    %127 = vmatpush1.msra.mxu0 0.0
    %128 = vmatprep.subr.mxu0 0.0
    %129 = vmatpush1.msra.mxu0 0.0
    %130 = vmatprep.subr.mxu0 0.0
    %131 = vmatpush1.msra.mxu0 0.0
    %132 = vmatprep.subr.mxu0 0.0
    %133 = vmatpush1.msra.mxu0 0.0
    %134 = vmatprep.subr.mxu0 0.0
    %135 = vmatpush1.msra.mxu0 0.0
    %136 = vmatprep.subr.mxu0 0.0
    %137 = vmatpush1.msra.mxu0 0.0
    %138 = vmatprep.subr.mxu0 0.0
    %139 = vmatpush1.msra.mxu0 0.0
    %140 = vmatprep.subr.mxu0 0.0
    %141 = vmatpush1.msra.mxu0 0.0
    %142 = vmatprep.subr.mxu0 0.0
    %143 = vmatpush1.msra.mxu0 0.0
    %144 = vmatprep.mubr.f32.mxu0 0.0
    %145 = vmatmul.mubr.f32.gmra.mrb[0].mxu0 %v71
    %v146 = vpop.f32.mrb[0].mxu0
    %v147 = vadd.f32 %v67, %v146
    %v148 = vpop.f32.mrb[0].mxu0
    %149 = vmatprep.mubr.f32.mxu0 0.0
    %150 = vmatmul.mubr.f32.gmra.mrb[0].mxu0 %v74
    %v151 = vpop.f32.mrb[0].mxu0
    %v152 = vadd.f32 %v67, %v151
    %v153 = vpop.f32.mrb[0].mxu0
    %154 = vdwg.mxu0
    %v155 = vld [vmem:[%s2] sm:$0xff]
    %v156 = vld [vmem:[%s2 + $0x8] sm:$0xff]
    %v157 = vld [vmem:[%s2 + $0x10] sm:$0xff]
    %v158 = vld [vmem:[%s2 + $0x18] sm:$0xff]
    %vm159 = vcmask 261120
    %v161 = vsel %vm159, 0.0, 0
    %163 = vmatprep.subr.mxu0 0.0
    %164 = vmatpush1.msra.mxu0 %v155
    %165 = vmatprep.subr.mxu0 0.0
    %166 = vmatpush1.msra.mxu0 %v156
    %167 = vmatprep.subr.mxu0 0.0
    %168 = vmatpush1.msra.mxu0 %v157
    %169 = vmatprep.subr.mxu0 0.0
    %170 = vmatpush1.msra.mxu0 %v158
    %171 = vmatprep.subr.mxu0 0.0
    %172 = vmatpush1.msra.mxu0 0.0
    %173 = vmatprep.subr.mxu0 0.0
    %174 = vmatpush1.msra.mxu0 0.0
    %175 = vmatprep.subr.mxu0 0.0
    %176 = vmatpush1.msra.mxu0 0.0
    %177 = vmatprep.subr.mxu0 0.0
    %178 = vmatpush1.msra.mxu0 0.0
    %179 = vmatprep.subr.mxu0 0.0
    %180 = vmatpush1.msra.mxu0 0.0
    %181 = vmatprep.subr.mxu0 0.0
    %182 = vmatpush1.msra.mxu0 0.0
    %183 = vmatprep.subr.mxu0 0.0
    %184 = vmatpush1.msra.mxu0 0.0
    %185 = vmatprep.subr.mxu0 0.0
    %186 = vmatpush1.msra.mxu0 0.0
    %187 = vmatprep.subr.mxu0 0.0
    %188 = vmatpush1.msra.mxu0 0.0
    %189 = vmatprep.subr.mxu0 0.0
    %190 = vmatpush1.msra.mxu0 0.0
    %191 = vmatprep.subr.mxu0 0.0
    %192 = vmatpush1.msra.mxu0 0.0
    %193 = vmatprep.subr.mxu0 0.0
    %194 = vmatpush1.msra.mxu0 0.0
    %195 = vmatprep.subr.mxu0 0.0
    %196 = vmatpush1.msra.mxu0 0.0
    %197 = vmatprep.subr.mxu0 0.0
    %198 = vmatpush1.msra.mxu0 0.0
    %199 = vmatprep.subr.mxu0 0.0
    %200 = vmatpush1.msra.mxu0 0.0
    %201 = vmatprep.subr.mxu0 0.0
    %202 = vmatpush1.msra.mxu0 0.0
    %203 = vmatprep.subr.mxu0 0.0
    %204 = vmatpush1.msra.mxu0 0.0
    %205 = vmatprep.subr.mxu0 0.0
    %206 = vmatpush1.msra.mxu0 0.0
    %207 = vmatprep.subr.mxu0 0.0
    %208 = vmatpush1.msra.mxu0 0.0
    %209 = vmatprep.subr.mxu0 0.0
    %210 = vmatpush1.msra.mxu0 0.0
    %211 = vmatprep.subr.mxu0 0.0
    %212 = vmatpush1.msra.mxu0 0.0
    %213 = vmatprep.subr.mxu0 0.0
    %214 = vmatpush1.msra.mxu0 0.0
    %215 = vmatprep.subr.mxu0 0.0
    %216 = vmatpush1.msra.mxu0 0.0
    %217 = vmatprep.subr.mxu0 0.0
    %218 = vmatpush1.msra.mxu0 0.0
    %219 = vmatprep.subr.mxu0 0.0
    %220 = vmatpush1.msra.mxu0 0.0
    %221 = vmatprep.subr.mxu0 0.0
    %222 = vmatpush1.msra.mxu0 0.0
    %223 = vmatprep.subr.mxu0 0.0
    %224 = vmatpush1.msra.mxu0 0.0
    %225 = vmatprep.subr.mxu0 0.0
    %226 = vmatpush1.msra.mxu0 0.0
    %227 = vmatprep.mubr.f32.mxu0 0.0
    %228 = vmatmul.mubr.f32.gmra.mrb[0].mxu0 %v161
    %v229 = vpop.f32.mrb[0].mxu0
    %v230 = vadd.f32 0.0, %v229
    %v231 = vpop.f32.mrb[0].mxu0
    %232 = vdwg.mxu0
    %v233 = vadd.f32 %v147, %v230
    %v234 = vxor.u32 %v233, 2147483648
    %v235 = vmul.f32 %v234, 1.442695
    %v236 = vpow.pop %v235
    %v237 = vadd.f32 %v236, 1.0
    %v238 = vrcp.pop %v237
    %v239 = vmul.f32 1.0, %v238
    %v240 = vtanh.pop %v233
    %v241 = vmul.f32 %v239, 0.0
    %243 = vrot.lane.b32.xlu0 %v240, 64
    %v244 = vpop.permute.xlu0 %243
    %v246 = vmul.f32 %v239, %v244
    %248 = vrot.lane.b32.xlu0 %v246, 32
    %v249 = vpop.permute.xlu0 %248
    %v251 = vadd.f32 %v241, %v249
    %v252 = vtanh.pop %v251
    %254 = vrot.lane.b32.xlu0 %v252, 64
    %v255 = vpop.permute.xlu0 %254
    %v257 = vmul.f32 %v239, %v255
    %259 = vrot.lane.b32.xlu0 %v257, 32
    %v260 = vpop.permute.xlu0 %259
    %v261 = vsel %vm159, %v260, 0
    %263 = vmatprep.subr.mxu0 0.0
    %264 = vmatpush1.msra.mxu0 %v155
    %265 = vmatprep.subr.mxu0 0.0
    %266 = vmatpush1.msra.mxu0 %v156
    %267 = vmatprep.subr.mxu0 0.0
    %268 = vmatpush1.msra.mxu0 %v157
    %269 = vmatprep.subr.mxu0 0.0
    %270 = vmatpush1.msra.mxu0 %v158
    %271 = vmatprep.subr.mxu0 0.0
    %272 = vmatpush1.msra.mxu0 0.0
    %273 = vmatprep.subr.mxu0 0.0
    %274 = vmatpush1.msra.mxu0 0.0
    %275 = vmatprep.subr.mxu0 0.0
    %276 = vmatpush1.msra.mxu0 0.0
    %277 = vmatprep.subr.mxu0 0.0
    %278 = vmatpush1.msra.mxu0 0.0
    %279 = vmatprep.subr.mxu0 0.0
    %280 = vmatpush1.msra.mxu0 0.0
    %281 = vmatprep.subr.mxu0 0.0
    %282 = vmatpush1.msra.mxu0 0.0
    %283 = vmatprep.subr.mxu0 0.0
    %284 = vmatpush1.msra.mxu0 0.0
    %285 = vmatprep.subr.mxu0 0.0
    %286 = vmatpush1.msra.mxu0 0.0
    %287 = vmatprep.subr.mxu0 0.0
    %288 = vmatpush1.msra.mxu0 0.0
    %289 = vmatprep.subr.mxu0 0.0
    %290 = vmatpush1.msra.mxu0 0.0
    %291 = vmatprep.subr.mxu0 0.0
    %292 = vmatpush1.msra.mxu0 0.0
    %293 = vmatprep.subr.mxu0 0.0
    %294 = vmatpush1.msra.mxu0 0.0
    %295 = vmatprep.subr.mxu0 0.0
    %296 = vmatpush1.msra.mxu0 0.0
    %297 = vmatprep.subr.mxu0 0.0
    %298 = vmatpush1.msra.mxu0 0.0
    %299 = vmatprep.subr.mxu0 0.0
    %300 = vmatpush1.msra.mxu0 0.0
    %301 = vmatprep.subr.mxu0 0.0
    %302 = vmatpush1.msra.mxu0 0.0
    %303 = vmatprep.subr.mxu0 0.0
    %304 = vmatpush1.msra.mxu0 0.0
    %305 = vmatprep.subr.mxu0 0.0
    %306 = vmatpush1.msra.mxu0 0.0
    %307 = vmatprep.subr.mxu0 0.0
    %308 = vmatpush1.msra.mxu0 0.0
    %309 = vmatprep.subr.mxu0 0.0
    %310 = vmatpush1.msra.mxu0 0.0
    %311 = vmatprep.subr.mxu0 0.0
    %312 = vmatpush1.msra.mxu0 0.0
    %313 = vmatprep.subr.mxu0 0.0
    %314 = vmatpush1.msra.mxu0 0.0
    %315 = vmatprep.subr.mxu0 0.0
    %316 = vmatpush1.msra.mxu0 0.0
    %317 = vmatprep.subr.mxu0 0.0
    %318 = vmatpush1.msra.mxu0 0.0
    %319 = vmatprep.subr.mxu0 0.0
    %320 = vmatpush1.msra.mxu0 0.0
    %321 = vmatprep.subr.mxu0 0.0
    %322 = vmatpush1.msra.mxu0 0.0
    %323 = vmatprep.subr.mxu0 0.0
    %324 = vmatpush1.msra.mxu0 0.0
    %325 = vmatprep.subr.mxu0 0.0
    %326 = vmatpush1.msra.mxu0 0.0
    %327 = vmatprep.mubr.f32.mxu0 0.0
    %328 = vmatmul.mubr.f32.gmra.mrb[0].mxu0 %v261
    %v329 = vpop.f32.mrb[0].mxu0
    %v330 = vadd.f32 0.0, %v329
    %v331 = vpop.f32.mrb[0].mxu0
    %332 = vdwg.mxu0
    %v334 = vrot.slane %v330, 6
    %v336 = vadd.f32 %v147, %v334
    %v337 = vxor.u32 %v336, 2147483648
    %v338 = vmul.f32 %v337, 1.442695
    %v339 = vpow.pop %v338
    %v340 = vadd.f32 %v339, 1.0
    %v341 = vrcp.pop %v340
    %v342 = vmul.f32 1.0, %v341
    %v343 = vtanh.pop %v336
    %v345 = vrot.slane %v251, 6
    %v347 = vmul.f32 %v342, %v345
    %349 = vrot.lane.b32.xlu0 %v343, 64
    %v350 = vpop.permute.xlu0 %349
    %v352 = vmul.f32 %v342, %v350
    %354 = vrot.lane.b32.xlu0 %v352, 32
    %v355 = vpop.permute.xlu0 %354
    %v357 = vadd.f32 %v347, %v355
    %v358 = vtanh.pop %v357
    %360 = vrot.lane.b32.xlu0 %v358, 64
    %v361 = vpop.permute.xlu0 %360
    %v363 = vmul.f32 %v342, %v361
    %v365 = vrot.slane %v363, 2
    %366 = vrot.lane.b32.xlu0 %v365, 32
    %v367 = vpop.permute.xlu0 %366
    %v368 = vsel %vm159, %v367, 0
    %370 = vmatprep.subr.mxu0 0.0
    %371 = vmatpush1.msra.mxu0 %v155
    %372 = vmatprep.subr.mxu0 0.0
    %373 = vmatpush1.msra.mxu0 %v156
    %374 = vmatprep.subr.mxu0 0.0
    %375 = vmatpush1.msra.mxu0 %v157
    %376 = vmatprep.subr.mxu0 0.0
    %377 = vmatpush1.msra.mxu0 %v158
    %378 = vmatprep.subr.mxu0 0.0
    %379 = vmatpush1.msra.mxu0 0.0
    %380 = vmatprep.subr.mxu0 0.0
    %381 = vmatpush1.msra.mxu0 0.0
    %382 = vmatprep.subr.mxu0 0.0
    %383 = vmatpush1.msra.mxu0 0.0
    %384 = vmatprep.subr.mxu0 0.0
    %385 = vmatpush1.msra.mxu0 0.0
    %386 = vmatprep.subr.mxu0 0.0
    %387 = vmatpush1.msra.mxu0 0.0
    %388 = vmatprep.subr.mxu0 0.0
    %389 = vmatpush1.msra.mxu0 0.0
    %390 = vmatprep.subr.mxu0 0.0
    %391 = vmatpush1.msra.mxu0 0.0
    %392 = vmatprep.subr.mxu0 0.0
    %393 = vmatpush1.msra.mxu0 0.0
    %394 = vmatprep.subr.mxu0 0.0
    %395 = vmatpush1.msra.mxu0 0.0
    %396 = vmatprep.subr.mxu0 0.0
    %397 = vmatpush1.msra.mxu0 0.0
    %398 = vmatprep.subr.mxu0 0.0
    %399 = vmatpush1.msra.mxu0 0.0
    %400 = vmatprep.subr.mxu0 0.0
    %401 = vmatpush1.msra.mxu0 0.0
    %402 = vmatprep.subr.mxu0 0.0
    %403 = vmatpush1.msra.mxu0 0.0
    %404 = vmatprep.subr.mxu0 0.0
    %405 = vmatpush1.msra.mxu0 0.0
    %406 = vmatprep.subr.mxu0 0.0
    %407 = vmatpush1.msra.mxu0 0.0
    %408 = vmatprep.subr.mxu0 0.0
    %409 = vmatpush1.msra.mxu0 0.0
    %410 = vmatprep.subr.mxu0 0.0
    %411 = vmatpush1.msra.mxu0 0.0
    %412 = vmatprep.subr.mxu0 0.0
    %413 = vmatpush1.msra.mxu0 0.0
    %414 = vmatprep.subr.mxu0 0.0
    %415 = vmatpush1.msra.mxu0 0.0
    %416 = vmatprep.subr.mxu0 0.0
    %417 = vmatpush1.msra.mxu0 0.0
    %418 = vmatprep.subr.mxu0 0.0
    %419 = vmatpush1.msra.mxu0 0.0
    %420 = vmatprep.subr.mxu0 0.0
    %421 = vmatpush1.msra.mxu0 0.0
    %422 = vmatprep.subr.mxu0 0.0
    %423 = vmatpush1.msra.mxu0 0.0
    %424 = vmatprep.subr.mxu0 0.0
    %425 = vmatpush1.msra.mxu0 0.0
    %426 = vmatprep.subr.mxu0 0.0
    %427 = vmatpush1.msra.mxu0 0.0
    %428 = vmatprep.subr.mxu0 0.0
    %429 = vmatpush1.msra.mxu0 0.0
    %430 = vmatprep.subr.mxu0 0.0
    %431 = vmatpush1.msra.mxu0 0.0
    %432 = vmatprep.subr.mxu0 0.0
    %433 = vmatpush1.msra.mxu0 0.0
    %434 = vmatprep.mubr.f32.mxu0 0.0
    %435 = vmatmul.mubr.f32.gmra.mrb[0].mxu0 %v368
    %v436 = vpop.f32.mrb[0].mxu0
    %v437 = vadd.f32 0.0, %v436
    %v438 = vpop.f32.mrb[0].mxu0
    %439 = vdwg.mxu0
    %v441 = vrot.slane %v437, 4
    %v443 = vadd.f32 %v147, %v441
    %v444 = vxor.u32 %v443, 2147483648
    %v445 = vmul.f32 %v444, 1.442695
    %v446 = vpow.pop %v445
    %v447 = vadd.f32 %v446, 1.0
    %v448 = vrcp.pop %v447
    %v449 = vmul.f32 1.0, %v448
    %v450 = vtanh.pop %v443
    %v452 = vrot.slane %v357, 6
    %v454 = vmul.f32 %v449, %v452
    %456 = vrot.lane.b32.xlu0 %v450, 64
    %v457 = vpop.permute.xlu0 %456
    %v459 = vmul.f32 %v449, %v457
    %461 = vrot.lane.b32.xlu0 %v459, 32
    %v462 = vpop.permute.xlu0 %461
    %v464 = vadd.f32 %v454, %v462
    %v465 = vtanh.pop %v464
    %467 = vrot.lane.b32.xlu0 %v465, 64
    %v468 = vpop.permute.xlu0 %467
    %v470 = vmul.f32 %v449, %v468
    %v472 = vrot.slane %v470, 4
    %473 = vrot.lane.b32.xlu0 %v472, 32
    %v474 = vpop.permute.xlu0 %473
    %v475 = vsel %vm159, %v474, 0
    %477 = vmatprep.subr.mxu0 0.0
    %478 = vmatpush1.msra.mxu0 %v155
    %479 = vmatprep.subr.mxu0 0.0
    %480 = vmatpush1.msra.mxu0 %v156
    %481 = vmatprep.subr.mxu0 0.0
    %482 = vmatpush1.msra.mxu0 %v157
    %483 = vmatprep.subr.mxu0 0.0
    %484 = vmatpush1.msra.mxu0 %v158
    %485 = vmatprep.subr.mxu0 0.0
    %486 = vmatpush1.msra.mxu0 0.0
    %487 = vmatprep.subr.mxu0 0.0
    %488 = vmatpush1.msra.mxu0 0.0
    %489 = vmatprep.subr.mxu0 0.0
    %490 = vmatpush1.msra.mxu0 0.0
    %491 = vmatprep.subr.mxu0 0.0
    %492 = vmatpush1.msra.mxu0 0.0
    %493 = vmatprep.subr.mxu0 0.0
    %494 = vmatpush1.msra.mxu0 0.0
    %495 = vmatprep.subr.mxu0 0.0
    %496 = vmatpush1.msra.mxu0 0.0
    %497 = vmatprep.subr.mxu0 0.0
    %498 = vmatpush1.msra.mxu0 0.0
    %499 = vmatprep.subr.mxu0 0.0
    %500 = vmatpush1.msra.mxu0 0.0
    %501 = vmatprep.subr.mxu0 0.0
    %502 = vmatpush1.msra.mxu0 0.0
    %503 = vmatprep.subr.mxu0 0.0
    %504 = vmatpush1.msra.mxu0 0.0
    %505 = vmatprep.subr.mxu0 0.0
    %506 = vmatpush1.msra.mxu0 0.0
    %507 = vmatprep.subr.mxu0 0.0
    %508 = vmatpush1.msra.mxu0 0.0
    %509 = vmatprep.subr.mxu0 0.0
    %510 = vmatpush1.msra.mxu0 0.0
    %511 = vmatprep.subr.mxu0 0.0
    %512 = vmatpush1.msra.mxu0 0.0
    %513 = vmatprep.subr.mxu0 0.0
    %514 = vmatpush1.msra.mxu0 0.0
    %515 = vmatprep.subr.mxu0 0.0
    %516 = vmatpush1.msra.mxu0 0.0
    %517 = vmatprep.subr.mxu0 0.0
    %518 = vmatpush1.msra.mxu0 0.0
    %519 = vmatprep.subr.mxu0 0.0
    %520 = vmatpush1.msra.mxu0 0.0
    %521 = vmatprep.subr.mxu0 0.0
    %522 = vmatpush1.msra.mxu0 0.0
    %523 = vmatprep.subr.mxu0 0.0
    %524 = vmatpush1.msra.mxu0 0.0
    %525 = vmatprep.subr.mxu0 0.0
    %526 = vmatpush1.msra.mxu0 0.0
    %527 = vmatprep.subr.mxu0 0.0
    %528 = vmatpush1.msra.mxu0 0.0
    %529 = vmatprep.subr.mxu0 0.0
    %530 = vmatpush1.msra.mxu0 0.0
    %531 = vmatprep.subr.mxu0 0.0
    %532 = vmatpush1.msra.mxu0 0.0
    %533 = vmatprep.subr.mxu0 0.0
    %534 = vmatpush1.msra.mxu0 0.0
    %535 = vmatprep.subr.mxu0 0.0
    %536 = vmatpush1.msra.mxu0 0.0
    %537 = vmatprep.subr.mxu0 0.0
    %538 = vmatpush1.msra.mxu0 0.0
    %539 = vmatprep.subr.mxu0 0.0
    %540 = vmatpush1.msra.mxu0 0.0
    %541 = vmatprep.mubr.f32.mxu0 0.0
    %542 = vmatmul.mubr.f32.gmra.mrb[0].mxu0 %v475
    %v543 = vpop.f32.mrb[0].mxu0
    %v544 = vadd.f32 0.0, %v543
    %v545 = vpop.f32.mrb[0].mxu0
    %546 = vdwg.mxu0
    %v548 = vrot.slane %v544, 2
    %v550 = vadd.f32 %v147, %v548
    %v551 = vxor.u32 %v550, 2147483648
    %v552 = vmul.f32 %v551, 1.442695
    %v553 = vpow.pop %v552
    %v554 = vadd.f32 %v553, 1.0
    %v555 = vrcp.pop %v554
    %v556 = vmul.f32 1.0, %v555
    %v557 = vtanh.pop %v550
    %v559 = vrot.slane %v464, 6
    %v561 = vmul.f32 %v556, %v559
    %563 = vrot.lane.b32.xlu0 %v557, 64
    %v564 = vpop.permute.xlu0 %563
    %v566 = vmul.f32 %v556, %v564
    %568 = vrot.lane.b32.xlu0 %v566, 32
    %v569 = vpop.permute.xlu0 %568
    %v571 = vadd.f32 %v561, %v569
    %v572 = vtanh.pop %v571
    %574 = vrot.lane.b32.xlu0 %v572, 64
    %v575 = vpop.permute.xlu0 %574
    %v577 = vmul.f32 %v556, %v575
    %v579 = vrot.slane %v577, 6
    %580 = vrot.lane.b32.xlu0 %v579, 32
    %v581 = vpop.permute.xlu0 %580
    %v582 = vsel %vm159, %v581, 0
    %584 = vmatprep.subr.mxu0 0.0
    %585 = vmatpush1.msra.mxu0 %v155
    %586 = vmatprep.subr.mxu0 0.0
    %587 = vmatpush1.msra.mxu0 %v156
    %588 = vmatprep.subr.mxu0 0.0
    %589 = vmatpush1.msra.mxu0 %v157
    %590 = vmatprep.subr.mxu0 0.0
    %591 = vmatpush1.msra.mxu0 %v158
    %592 = vmatprep.subr.mxu0 0.0
    %593 = vmatpush1.msra.mxu0 0.0
    %594 = vmatprep.subr.mxu0 0.0
    %595 = vmatpush1.msra.mxu0 0.0
    %596 = vmatprep.subr.mxu0 0.0
    %597 = vmatpush1.msra.mxu0 0.0
    %598 = vmatprep.subr.mxu0 0.0
    %599 = vmatpush1.msra.mxu0 0.0
    %600 = vmatprep.subr.mxu0 0.0
    %601 = vmatpush1.msra.mxu0 0.0
    %602 = vmatprep.subr.mxu0 0.0
    %603 = vmatpush1.msra.mxu0 0.0
    %604 = vmatprep.subr.mxu0 0.0
    %605 = vmatpush1.msra.mxu0 0.0
    %606 = vmatprep.subr.mxu0 0.0
    %607 = vmatpush1.msra.mxu0 0.0
    %608 = vmatprep.subr.mxu0 0.0
    %609 = vmatpush1.msra.mxu0 0.0
    %610 = vmatprep.subr.mxu0 0.0
    %611 = vmatpush1.msra.mxu0 0.0
    %612 = vmatprep.subr.mxu0 0.0
    %613 = vmatpush1.msra.mxu0 0.0
    %614 = vmatprep.subr.mxu0 0.0
    %615 = vmatpush1.msra.mxu0 0.0
    %616 = vmatprep.subr.mxu0 0.0
    %617 = vmatpush1.msra.mxu0 0.0
    %618 = vmatprep.subr.mxu0 0.0
    %619 = vmatpush1.msra.mxu0 0.0
    %620 = vmatprep.subr.mxu0 0.0
    %621 = vmatpush1.msra.mxu0 0.0
    %622 = vmatprep.subr.mxu0 0.0
    %623 = vmatpush1.msra.mxu0 0.0
    %624 = vmatprep.subr.mxu0 0.0
    %625 = vmatpush1.msra.mxu0 0.0
    %626 = vmatprep.subr.mxu0 0.0
    %627 = vmatpush1.msra.mxu0 0.0
    %628 = vmatprep.subr.mxu0 0.0
    %629 = vmatpush1.msra.mxu0 0.0
    %630 = vmatprep.subr.mxu0 0.0
    %631 = vmatpush1.msra.mxu0 0.0
    %632 = vmatprep.subr.mxu0 0.0
    %633 = vmatpush1.msra.mxu0 0.0
    %634 = vmatprep.subr.mxu0 0.0
    %635 = vmatpush1.msra.mxu0 0.0
    %636 = vmatprep.subr.mxu0 0.0
    %637 = vmatpush1.msra.mxu0 0.0
    %638 = vmatprep.subr.mxu0 0.0
    %639 = vmatpush1.msra.mxu0 0.0
    %640 = vmatprep.subr.mxu0 0.0
    %641 = vmatpush1.msra.mxu0 0.0
    %642 = vmatprep.subr.mxu0 0.0
    %643 = vmatpush1.msra.mxu0 0.0
    %644 = vmatprep.subr.mxu0 0.0
    %645 = vmatpush1.msra.mxu0 0.0
    %646 = vmatprep.subr.mxu0 0.0
    %647 = vmatpush1.msra.mxu0 0.0
    %648 = vmatprep.mubr.f32.mxu0 0.0
    %649 = vmatmul.mubr.f32.gmra.mrb[0].mxu0 %v582
    %v650 = vpop.f32.mrb[0].mxu0
    %v651 = vadd.f32 0.0, %v650
    %v652 = vpop.f32.mrb[0].mxu0
    %653 = vdwg.mxu0
    %v654 = vadd.f32 %v152, %v651
    %v655 = vxor.u32 %v654, 2147483648
    %v656 = vmul.f32 %v655, 1.442695
    %v657 = vpow.pop %v656
    %v658 = vadd.f32 %v657, 1.0
    %v659 = vrcp.pop %v658
    %v660 = vmul.f32 1.0, %v659
    %v661 = vtanh.pop %v654
    %v663 = vrot.slane %v571, 6
    %v665 = vmul.f32 %v660, %v663
    %667 = vrot.lane.b32.xlu0 %v661, 64
    %v668 = vpop.permute.xlu0 %667
    %v670 = vmul.f32 %v660, %v668
    %672 = vrot.lane.b32.xlu0 %v670, 32
    %v673 = vpop.permute.xlu0 %672
    %v675 = vadd.f32 %v665, %v673
    %v676 = vtanh.pop %v675
    %678 = vrot.lane.b32.xlu0 %v676, 64
    %v679 = vpop.permute.xlu0 %678
    %v681 = vmul.f32 %v660, %v679
    %683 = vrot.lane.b32.xlu0 %v681, 32
    %v684 = vpop.permute.xlu0 %683
    %v685 = vsel %vm159, %v684, 0
    %687 = vmatprep.subr.mxu0 0.0
    %688 = vmatpush1.msra.mxu0 %v155
    %689 = vmatprep.subr.mxu0 0.0
    %690 = vmatpush1.msra.mxu0 %v156
    %691 = vmatprep.subr.mxu0 0.0
    %692 = vmatpush1.msra.mxu0 %v157
    %693 = vmatprep.subr.mxu0 0.0
    %694 = vmatpush1.msra.mxu0 %v158
    %695 = vmatprep.subr.mxu0 0.0
    %696 = vmatpush1.msra.mxu0 0.0
    %697 = vmatprep.subr.mxu0 0.0
    %698 = vmatpush1.msra.mxu0 0.0
    %699 = vmatprep.subr.mxu0 0.0
    %700 = vmatpush1.msra.mxu0 0.0
    %701 = vmatprep.subr.mxu0 0.0
    %702 = vmatpush1.msra.mxu0 0.0
    %703 = vmatprep.subr.mxu0 0.0
    %704 = vmatpush1.msra.mxu0 0.0
    %705 = vmatprep.subr.mxu0 0.0
    %706 = vmatpush1.msra.mxu0 0.0
    %707 = vmatprep.subr.mxu0 0.0
    %708 = vmatpush1.msra.mxu0 0.0
    %709 = vmatprep.subr.mxu0 0.0
    %710 = vmatpush1.msra.mxu0 0.0
    %711 = vmatprep.subr.mxu0 0.0
    %712 = vmatpush1.msra.mxu0 0.0
    %713 = vmatprep.subr.mxu0 0.0
    %714 = vmatpush1.msra.mxu0 0.0
    %715 = vmatprep.subr.mxu0 0.0
    %716 = vmatpush1.msra.mxu0 0.0
    %717 = vmatprep.subr.mxu0 0.0
    %718 = vmatpush1.msra.mxu0 0.0
    %719 = vmatprep.subr.mxu0 0.0
    %720 = vmatpush1.msra.mxu0 0.0
    %721 = vmatprep.subr.mxu0 0.0
    %722 = vmatpush1.msra.mxu0 0.0
    %723 = vmatprep.subr.mxu0 0.0
    %724 = vmatpush1.msra.mxu0 0.0
    %725 = vmatprep.subr.mxu0 0.0
    %726 = vmatpush1.msra.mxu0 0.0
    %727 = vmatprep.subr.mxu0 0.0
    %728 = vmatpush1.msra.mxu0 0.0
    %729 = vmatprep.subr.mxu0 0.0
    %730 = vmatpush1.msra.mxu0 0.0
    %731 = vmatprep.subr.mxu0 0.0
    %732 = vmatpush1.msra.mxu0 0.0
    %733 = vmatprep.subr.mxu0 0.0
    %734 = vmatpush1.msra.mxu0 0.0
    %735 = vmatprep.subr.mxu0 0.0
    %736 = vmatpush1.msra.mxu0 0.0
    %737 = vmatprep.subr.mxu0 0.0
    %738 = vmatpush1.msra.mxu0 0.0
    %739 = vmatprep.subr.mxu0 0.0
    %740 = vmatpush1.msra.mxu0 0.0
    %741 = vmatprep.subr.mxu0 0.0
    %742 = vmatpush1.msra.mxu0 0.0
    %743 = vmatprep.subr.mxu0 0.0
    %744 = vmatpush1.msra.mxu0 0.0
    %745 = vmatprep.subr.mxu0 0.0
    %746 = vmatpush1.msra.mxu0 0.0
    %747 = vmatprep.subr.mxu0 0.0
    %748 = vmatpush1.msra.mxu0 0.0
    %749 = vmatprep.subr.mxu0 0.0
    %750 = vmatpush1.msra.mxu0 0.0
    %751 = vmatprep.mubr.f32.mxu0 0.0
    %752 = vmatmul.mubr.f32.gmra.mrb[0].mxu0 %v685
    %v753 = vpop.f32.mrb[0].mxu0
    %v754 = vadd.f32 0.0, %v753
    %v755 = vpop.f32.mrb[0].mxu0
    %756 = vdwg.mxu0
    %v758 = vrot.slane %v754, 6
    %v760 = vadd.f32 %v152, %v758
    %v761 = vxor.u32 %v760, 2147483648
    %v762 = vmul.f32 %v761, 1.442695
    %v763 = vpow.pop %v762
    %v764 = vadd.f32 %v763, 1.0
    %v765 = vrcp.pop %v764
    %v766 = vmul.f32 1.0, %v765
    %v767 = vtanh.pop %v760
    %v769 = vrot.slane %v675, 6
    %v771 = vmul.f32 %v766, %v769
    %773 = vrot.lane.b32.xlu0 %v767, 64
    %v774 = vpop.permute.xlu0 %773
    %v776 = vmul.f32 %v766, %v774
    %778 = vrot.lane.b32.xlu0 %v776, 32
    %v779 = vpop.permute.xlu0 %778
    %v781 = vadd.f32 %v771, %v779
    %v782 = vtanh.pop %v781
    %784 = vrot.lane.b32.xlu0 %v782, 64
    %v785 = vpop.permute.xlu0 %784
    %v787 = vmul.f32 %v766, %v785
    %v789 = vrot.slane %v787, 2
    %790 = vrot.lane.b32.xlu0 %v789, 32
    %v791 = vpop.permute.xlu0 %790
    %v792 = vsel %vm159, %v791, 0
    %794 = vmatprep.subr.mxu0 0.0
    %795 = vmatpush1.msra.mxu0 %v155
    %796 = vmatprep.subr.mxu0 0.0
    %797 = vmatpush1.msra.mxu0 %v156
    %798 = vmatprep.subr.mxu0 0.0
    %799 = vmatpush1.msra.mxu0 %v157
    %800 = vmatprep.subr.mxu0 0.0
    %801 = vmatpush1.msra.mxu0 %v158
    %802 = vmatprep.subr.mxu0 0.0
    %803 = vmatpush1.msra.mxu0 0.0
    %804 = vmatprep.subr.mxu0 0.0
    %805 = vmatpush1.msra.mxu0 0.0
    %806 = vmatprep.subr.mxu0 0.0
    %807 = vmatpush1.msra.mxu0 0.0
    %808 = vmatprep.subr.mxu0 0.0
    %809 = vmatpush1.msra.mxu0 0.0
    %810 = vmatprep.subr.mxu0 0.0
    %811 = vmatpush1.msra.mxu0 0.0
    %812 = vmatprep.subr.mxu0 0.0
    %813 = vmatpush1.msra.mxu0 0.0
    %814 = vmatprep.subr.mxu0 0.0
    %815 = vmatpush1.msra.mxu0 0.0
    %816 = vmatprep.subr.mxu0 0.0
    %817 = vmatpush1.msra.mxu0 0.0
    %818 = vmatprep.subr.mxu0 0.0
    %819 = vmatpush1.msra.mxu0 0.0
    %820 = vmatprep.subr.mxu0 0.0
    %821 = vmatpush1.msra.mxu0 0.0
    %822 = vmatprep.subr.mxu0 0.0
    %823 = vmatpush1.msra.mxu0 0.0
    %824 = vmatprep.subr.mxu0 0.0
    %825 = vmatpush1.msra.mxu0 0.0
    %826 = vmatprep.subr.mxu0 0.0
    %827 = vmatpush1.msra.mxu0 0.0
    %828 = vmatprep.subr.mxu0 0.0
    %829 = vmatpush1.msra.mxu0 0.0
    %830 = vmatprep.subr.mxu0 0.0
    %831 = vmatpush1.msra.mxu0 0.0
    %832 = vmatprep.subr.mxu0 0.0
    %833 = vmatpush1.msra.mxu0 0.0
    %834 = vmatprep.subr.mxu0 0.0
    %835 = vmatpush1.msra.mxu0 0.0
    %836 = vmatprep.subr.mxu0 0.0
    %837 = vmatpush1.msra.mxu0 0.0
    %838 = vmatprep.subr.mxu0 0.0
    %839 = vmatpush1.msra.mxu0 0.0
    %840 = vmatprep.subr.mxu0 0.0
    %841 = vmatpush1.msra.mxu0 0.0
    %842 = vmatprep.subr.mxu0 0.0
    %843 = vmatpush1.msra.mxu0 0.0
    %844 = vmatprep.subr.mxu0 0.0
    %845 = vmatpush1.msra.mxu0 0.0
    %846 = vmatprep.subr.mxu0 0.0
    %847 = vmatpush1.msra.mxu0 0.0
    %848 = vmatprep.subr.mxu0 0.0
    %849 = vmatpush1.msra.mxu0 0.0
    %850 = vmatprep.subr.mxu0 0.0
    %851 = vmatpush1.msra.mxu0 0.0
    %852 = vmatprep.subr.mxu0 0.0
    %853 = vmatpush1.msra.mxu0 0.0
    %854 = vmatprep.subr.mxu0 0.0
    %855 = vmatpush1.msra.mxu0 0.0
    %856 = vmatprep.subr.mxu0 0.0
    %857 = vmatpush1.msra.mxu0 0.0
    %858 = vmatprep.mubr.f32.mxu0 0.0
    %859 = vmatmul.mubr.f32.gmra.mrb[0].mxu0 %v792
    %v860 = vpop.f32.mrb[0].mxu0
    %v861 = vadd.f32 0.0, %v860
    %v862 = vpop.f32.mrb[0].mxu0
    %863 = vdwg.mxu0
    %v865 = vrot.slane %v861, 4
    %v867 = vadd.f32 %v152, %v865
    %v868 = vxor.u32 %v867, 2147483648
    %v869 = vmul.f32 %v868, 1.442695
    %v870 = vpow.pop %v869
    %v871 = vadd.f32 %v870, 1.0
    %v872 = vrcp.pop %v871
    %v873 = vmul.f32 1.0, %v872
    %v874 = vtanh.pop %v867
    %v876 = vrot.slane %v781, 6
    %v878 = vmul.f32 %v873, %v876
    %880 = vrot.lane.b32.xlu0 %v874, 64
    %v881 = vpop.permute.xlu0 %880
    %v883 = vmul.f32 %v873, %v881
    %885 = vrot.lane.b32.xlu0 %v883, 32
    %v886 = vpop.permute.xlu0 %885
    %v888 = vadd.f32 %v878, %v886
    %v889 = vtanh.pop %v888
    %891 = vrot.lane.b32.xlu0 %v889, 64
    %v892 = vpop.permute.xlu0 %891
    %v894 = vmul.f32 %v873, %v892
    %v896 = vrot.slane %v894, 4
    %897 = vrot.lane.b32.xlu0 %v896, 32
    %v898 = vpop.permute.xlu0 %897
    %v899 = vsel %vm159, %v898, 0
    %901 = vmatprep.subr.mxu0 0.0
    %902 = vmatpush1.msra.mxu0 %v155
    %903 = vmatprep.subr.mxu0 0.0
    %904 = vmatpush1.msra.mxu0 %v156
    %905 = vmatprep.subr.mxu0 0.0
    %906 = vmatpush1.msra.mxu0 %v157
    %907 = vmatprep.subr.mxu0 0.0
    %908 = vmatpush1.msra.mxu0 %v158
    %909 = vmatprep.subr.mxu0 0.0
    %910 = vmatpush1.msra.mxu0 0.0
    %911 = vmatprep.subr.mxu0 0.0
    %912 = vmatpush1.msra.mxu0 0.0
    %913 = vmatprep.subr.mxu0 0.0
    %914 = vmatpush1.msra.mxu0 0.0
    %915 = vmatprep.subr.mxu0 0.0
    %916 = vmatpush1.msra.mxu0 0.0
    %917 = vmatprep.subr.mxu0 0.0
    %918 = vmatpush1.msra.mxu0 0.0
    %919 = vmatprep.subr.mxu0 0.0
    %920 = vmatpush1.msra.mxu0 0.0
    %921 = vmatprep.subr.mxu0 0.0
    %922 = vmatpush1.msra.mxu0 0.0
    %923 = vmatprep.subr.mxu0 0.0
    %924 = vmatpush1.msra.mxu0 0.0
    %925 = vmatprep.subr.mxu0 0.0
    %926 = vmatpush1.msra.mxu0 0.0
    %927 = vmatprep.subr.mxu0 0.0
    %928 = vmatpush1.msra.mxu0 0.0
    %929 = vmatprep.subr.mxu0 0.0
    %930 = vmatpush1.msra.mxu0 0.0
    %931 = vmatprep.subr.mxu0 0.0
    %932 = vmatpush1.msra.mxu0 0.0
    %933 = vmatprep.subr.mxu0 0.0
    %934 = vmatpush1.msra.mxu0 0.0
    %935 = vmatprep.subr.mxu0 0.0
    %936 = vmatpush1.msra.mxu0 0.0
    %937 = vmatprep.subr.mxu0 0.0
    %938 = vmatpush1.msra.mxu0 0.0
    %939 = vmatprep.subr.mxu0 0.0
    %940 = vmatpush1.msra.mxu0 0.0
    %941 = vmatprep.subr.mxu0 0.0
    %942 = vmatpush1.msra.mxu0 0.0
    %943 = vmatprep.subr.mxu0 0.0
    %944 = vmatpush1.msra.mxu0 0.0
    %945 = vmatprep.subr.mxu0 0.0
    %946 = vmatpush1.msra.mxu0 0.0
    %947 = vmatprep.subr.mxu0 0.0
    %948 = vmatpush1.msra.mxu0 0.0
    %949 = vmatprep.subr.mxu0 0.0
    %950 = vmatpush1.msra.mxu0 0.0
    %951 = vmatprep.subr.mxu0 0.0
    %952 = vmatpush1.msra.mxu0 0.0
    %953 = vmatprep.subr.mxu0 0.0
    %954 = vmatpush1.msra.mxu0 0.0
    %955 = vmatprep.subr.mxu0 0.0
    %956 = vmatpush1.msra.mxu0 0.0
    %957 = vmatprep.subr.mxu0 0.0
    %958 = vmatpush1.msra.mxu0 0.0
    %959 = vmatprep.subr.mxu0 0.0
    %960 = vmatpush1.msra.mxu0 0.0
    %961 = vmatprep.subr.mxu0 0.0
    %962 = vmatpush1.msra.mxu0 0.0
    %963 = vmatprep.subr.mxu0 0.0
    %964 = vmatpush1.msra.mxu0 0.0
    %965 = vmatprep.mubr.f32.mxu0 0.0
    %966 = vmatmul.mubr.f32.gmra.mrb[0].mxu0 %v899
    %v967 = vpop.f32.mrb[0].mxu0
    %v968 = vadd.f32 0.0, %v967
    %v969 = vpop.f32.mrb[0].mxu0
    %970 = vdwg.mxu0
    %v972 = vrot.slane %v968, 2
    %v974 = vadd.f32 %v152, %v972
    %v975 = vxor.u32 %v974, 2147483648
    %v976 = vmul.f32 %v975, 1.442695
    %v977 = vpow.pop %v976
    %v978 = vadd.f32 %v977, 1.0
    %v979 = vrcp.pop %v978
    %v980 = vmul.f32 1.0, %v979
    %v981 = vtanh.pop %v974
    %v983 = vrot.slane %v888, 6
    %v985 = vmul.f32 %v980, %v983
    %987 = vrot.lane.b32.xlu0 %v981, 64
    %v988 = vpop.permute.xlu0 %987
    %v990 = vmul.f32 %v980, %v988
    %992 = vrot.lane.b32.xlu0 %v990, 32
    %v993 = vpop.permute.xlu0 %992
    %v995 = vadd.f32 %v985, %v993
    %v996 = vtanh.pop %v995
    %998 = vrot.lane.b32.xlu0 %v996, 64
    %v999 = vpop.permute.xlu0 %998
    %v1001 = vmul.f32 %v980, %v999
    %vm1002 = vcmask 1041408
    %v1003 = vsel %vm1002, %v257, %v363
    %v1004 = vsel %vm76, %v1003, %v470
    %vm1005 = vcmask 1045504
    %v1006 = vsel %vm1005, %v1004, %v577
    %v1007 = vsel %vm1002, %v681, %v787
    %v1008 = vsel %vm76, %v1007, %v894
    %v1009 = vsel %vm1005, %v1008, %v1001
    %v1010 = vld [vmem:[%s4] sm:$0xff]
    %v1011 = vld [vmem:[%s4 + $0x8] sm:$0xff]
    %v1012 = vld [vmem:[%s4 + $0x10] sm:$0xff]
    %v1013 = vld [vmem:[%s4 + $0x18] sm:$0xff]
    %v1014 = vld [vmem:[%s6] sm:$0x1]
    %v1016 = vlaneseq
    %v1017 = vshrl.u32 %v1016, 7
    %v1018 = vsub.s32 0, %v1017
    %v1019 = vrot.slane %v1014, %v1018
    %1023 = vrot.lane.b32.xlu0 %v1006, 32
    %v1024 = vpop.permute.xlu0 %1023
    %1025 = vrot.lane.b32.xlu0 %v1009, 32
    %v1026 = vpop.permute.xlu0 %1025
    %v1027 = vsel %vm159, %v1024, 0
    %v1029 = vsel %vm159, %v1026, 0
    %1031 = vmatprep.subr.mxu0 0.0
    %1032 = vmatpush1.msra.mxu0 %v1010
    %1033 = vmatprep.subr.mxu0 0.0
    %1034 = vmatpush1.msra.mxu0 %v1011
    %1035 = vmatprep.subr.mxu0 0.0
    %1036 = vmatpush1.msra.mxu0 %v1012
    %1037 = vmatprep.subr.mxu0 0.0
    %1038 = vmatpush1.msra.mxu0 %v1013
    %1039 = vmatprep.subr.mxu0 0.0
    %1040 = vmatpush1.msra.mxu0 0.0
    %1041 = vmatprep.subr.mxu0 0.0
    %1042 = vmatpush1.msra.mxu0 0.0
    %1043 = vmatprep.subr.mxu0 0.0
    %1044 = vmatpush1.msra.mxu0 0.0
    %1045 = vmatprep.subr.mxu0 0.0
    %1046 = vmatpush1.msra.mxu0 0.0
    %1047 = vmatprep.subr.mxu0 0.0
    %1048 = vmatpush1.msra.mxu0 0.0
    %1049 = vmatprep.subr.mxu0 0.0
    %1050 = vmatpush1.msra.mxu0 0.0
    %1051 = vmatprep.subr.mxu0 0.0
    %1052 = vmatpush1.msra.mxu0 0.0
    %1053 = vmatprep.subr.mxu0 0.0
    %1054 = vmatpush1.msra.mxu0 0.0
    %1055 = vmatprep.subr.mxu0 0.0
    %1056 = vmatpush1.msra.mxu0 0.0
    %1057 = vmatprep.subr.mxu0 0.0
    %1058 = vmatpush1.msra.mxu0 0.0
    %1059 = vmatprep.subr.mxu0 0.0
    %1060 = vmatpush1.msra.mxu0 0.0
    %1061 = vmatprep.subr.mxu0 0.0
    %1062 = vmatpush1.msra.mxu0 0.0
    %1063 = vmatprep.subr.mxu0 0.0
    %1064 = vmatpush1.msra.mxu0 0.0
    %1065 = vmatprep.subr.mxu0 0.0
    %1066 = vmatpush1.msra.mxu0 0.0
    %1067 = vmatprep.subr.mxu0 0.0
    %1068 = vmatpush1.msra.mxu0 0.0
    %1069 = vmatprep.subr.mxu0 0.0
    %1070 = vmatpush1.msra.mxu0 0.0
    %1071 = vmatprep.subr.mxu0 0.0
    %1072 = vmatpush1.msra.mxu0 0.0
    %1073 = vmatprep.subr.mxu0 0.0
    %1074 = vmatpush1.msra.mxu0 0.0
    %1075 = vmatprep.subr.mxu0 0.0
    %1076 = vmatpush1.msra.mxu0 0.0
    %1077 = vmatprep.subr.mxu0 0.0
    %1078 = vmatpush1.msra.mxu0 0.0
    %1079 = vmatprep.subr.mxu0 0.0
    %1080 = vmatpush1.msra.mxu0 0.0
    %1081 = vmatprep.subr.mxu0 0.0
    %1082 = vmatpush1.msra.mxu0 0.0
    %1083 = vmatprep.subr.mxu0 0.0
    %1084 = vmatpush1.msra.mxu0 0.0
    %1085 = vmatprep.subr.mxu0 0.0
    %1086 = vmatpush1.msra.mxu0 0.0
    %1087 = vmatprep.subr.mxu0 0.0
    %1088 = vmatpush1.msra.mxu0 0.0
    %1089 = vmatprep.subr.mxu0 0.0
    %1090 = vmatpush1.msra.mxu0 0.0
    %1091 = vmatprep.subr.mxu0 0.0
    %1092 = vmatpush1.msra.mxu0 0.0
    %1093 = vmatprep.subr.mxu0 0.0
    %1094 = vmatpush1.msra.mxu0 0.0
    %1095 = vmatprep.mubr.f32.mxu0 0.0
    %1096 = vmatmul.mubr.f32.gmra.mrb[0].mxu0 %v1027
    %v1097 = vpop.f32.mrb[0].mxu0
    %v1098 = vadd.f32 %v1019, %v1097
    %v1099 = vpop.f32.mrb[0].mxu0
    %1100 = vmatprep.mubr.f32.mxu0 0.0
    %1101 = vmatmul.mubr.f32.gmra.mrb[0].mxu0 %v1029
    %v1102 = vpop.f32.mrb[0].mxu0
    %v1103 = vadd.f32 %v1019, %v1102
    %v1104 = vpop.f32.mrb[0].mxu0
    %1105 = vdwg.mxu0
    %v1106 = vld [vmem:[#allocation5] sm:$0xff]
    %v1107 = vld [vmem:[#allocation5 + $0x8] sm:$0xff]
    %v1108 = vld [vmem:[#allocation5 + $0x10] sm:$0xff]
    %v1109 = vld [vmem:[#allocation5 + $0x18] sm:$0xff]
    %1110 = vmatprep.subr.mxu0 0.0
    %1111 = vmatpush1.msra.mxu0 %v1106
    %1112 = vmatprep.subr.mxu0 0.0
    %1113 = vmatpush1.msra.mxu0 %v1107
    %1114 = vmatprep.subr.mxu0 0.0
    %1115 = vmatpush1.msra.mxu0 %v1108
    %1116 = vmatprep.subr.mxu0 0.0
    %1117 = vmatpush1.msra.mxu0 %v1109
    %1118 = vmatprep.subr.mxu0 0.0
    %1119 = vmatpush1.msra.mxu0 0.0
    %1120 = vmatprep.subr.mxu0 0.0
    %1121 = vmatpush1.msra.mxu0 0.0
    %1122 = vmatprep.subr.mxu0 0.0
    %1123 = vmatpush1.msra.mxu0 0.0
    %1124 = vmatprep.subr.mxu0 0.0
    %1125 = vmatpush1.msra.mxu0 0.0
    %1126 = vmatprep.subr.mxu0 0.0
    %1127 = vmatpush1.msra.mxu0 0.0
    %1128 = vmatprep.subr.mxu0 0.0
    %1129 = vmatpush1.msra.mxu0 0.0
    %1130 = vmatprep.subr.mxu0 0.0
    %1131 = vmatpush1.msra.mxu0 0.0
    %1132 = vmatprep.subr.mxu0 0.0
    %1133 = vmatpush1.msra.mxu0 0.0
    %1134 = vmatprep.subr.mxu0 0.0
    %1135 = vmatpush1.msra.mxu0 0.0
    %1136 = vmatprep.subr.mxu0 0.0
    %1137 = vmatpush1.msra.mxu0 0.0
    %1138 = vmatprep.subr.mxu0 0.0
    %1139 = vmatpush1.msra.mxu0 0.0
    %1140 = vmatprep.subr.mxu0 0.0
    %1141 = vmatpush1.msra.mxu0 0.0
    %1142 = vmatprep.subr.mxu0 0.0
    %1143 = vmatpush1.msra.mxu0 0.0
    %1144 = vmatprep.subr.mxu0 0.0
    %1145 = vmatpush1.msra.mxu0 0.0
    %1146 = vmatprep.subr.mxu0 0.0
    %1147 = vmatpush1.msra.mxu0 0.0
    %1148 = vmatprep.subr.mxu0 0.0
    %1149 = vmatpush1.msra.mxu0 0.0
    %1150 = vmatprep.subr.mxu0 0.0
    %1151 = vmatpush1.msra.mxu0 0.0
    %1152 = vmatprep.subr.mxu0 0.0
    %1153 = vmatpush1.msra.mxu0 0.0
    %1154 = vmatprep.subr.mxu0 0.0
    %1155 = vmatpush1.msra.mxu0 0.0
    %1156 = vmatprep.subr.mxu0 0.0
    %1157 = vmatpush1.msra.mxu0 0.0
    %1158 = vmatprep.subr.mxu0 0.0
    %1159 = vmatpush1.msra.mxu0 0.0
    %1160 = vmatprep.subr.mxu0 0.0
    %1161 = vmatpush1.msra.mxu0 0.0
    %1162 = vmatprep.subr.mxu0 0.0
    %1163 = vmatpush1.msra.mxu0 0.0
    %1164 = vmatprep.subr.mxu0 0.0
    %1165 = vmatpush1.msra.mxu0 0.0
    %1166 = vmatprep.subr.mxu0 0.0
    %1167 = vmatpush1.msra.mxu0 0.0
    %1168 = vmatprep.subr.mxu0 0.0
    %1169 = vmatpush1.msra.mxu0 0.0
    %1170 = vmatprep.subr.mxu0 0.0
    %1171 = vmatpush1.msra.mxu0 0.0
    %1172 = vmatprep.subr.mxu0 0.0
    %1173 = vmatpush1.msra.mxu0 0.0
    %1174 = vmatprep.mubr.f32.mxu0 0.0
    %1175 = vmatmul.mubr.f32.gmra.mrb[0].mxu0 %v161
    %v1176 = vpop.f32.mrb[0].mxu0
    %v1177 = vadd.f32 0.0, %v1176
    %v1178 = vpop.f32.mrb[0].mxu0
    %1179 = vdwg.mxu0
    %v1180 = vadd.f32 %v1098, %v1177
    %v1181 = vxor.u32 %v1180, 2147483648
    %v1182 = vmul.f32 %v1181, 1.442695
    %v1183 = vpow.pop %v1182
    %v1184 = vadd.f32 %v1183, 1.0
    %v1185 = vrcp.pop %v1184
    %v1186 = vmul.f32 1.0, %v1185
    %v1187 = vtanh.pop %v1180
    %v1188 = vmul.f32 %v1186, 0.0
    %1190 = vrot.lane.b32.xlu0 %v1187, 64
    %v1191 = vpop.permute.xlu0 %1190
    %v1193 = vmul.f32 %v1186, %v1191
    %1195 = vrot.lane.b32.xlu0 %v1193, 32
    %v1196 = vpop.permute.xlu0 %1195
    %v1198 = vadd.f32 %v1188, %v1196
    %v1199 = vtanh.pop %v1198
    %1201 = vrot.lane.b32.xlu0 %v1199, 64
    %v1202 = vpop.permute.xlu0 %1201
    %v1204 = vmul.f32 %v1186, %v1202
    %1206 = vrot.lane.b32.xlu0 %v1204, 32
    %v1207 = vpop.permute.xlu0 %1206
    %v1208 = vsel %vm159, %v1207, 0
    %1210 = vmatprep.subr.mxu0 0.0
    %1211 = vmatpush1.msra.mxu0 %v1106
    %1212 = vmatprep.subr.mxu0 0.0
    %1213 = vmatpush1.msra.mxu0 %v1107
    %1214 = vmatprep.subr.mxu0 0.0
    %1215 = vmatpush1.msra.mxu0 %v1108
    %1216 = vmatprep.subr.mxu0 0.0
    %1217 = vmatpush1.msra.mxu0 %v1109
    %1218 = vmatprep.subr.mxu0 0.0
    %1219 = vmatpush1.msra.mxu0 0.0
    %1220 = vmatprep.subr.mxu0 0.0
    %1221 = vmatpush1.msra.mxu0 0.0
    %1222 = vmatprep.subr.mxu0 0.0
    %1223 = vmatpush1.msra.mxu0 0.0
    %1224 = vmatprep.subr.mxu0 0.0
    %1225 = vmatpush1.msra.mxu0 0.0
    %1226 = vmatprep.subr.mxu0 0.0
    %1227 = vmatpush1.msra.mxu0 0.0
    %1228 = vmatprep.subr.mxu0 0.0
    %1229 = vmatpush1.msra.mxu0 0.0
    %1230 = vmatprep.subr.mxu0 0.0
    %1231 = vmatpush1.msra.mxu0 0.0
    %1232 = vmatprep.subr.mxu0 0.0
    %1233 = vmatpush1.msra.mxu0 0.0
    %1234 = vmatprep.subr.mxu0 0.0
    %1235 = vmatpush1.msra.mxu0 0.0
    %1236 = vmatprep.subr.mxu0 0.0
    %1237 = vmatpush1.msra.mxu0 0.0
    %1238 = vmatprep.subr.mxu0 0.0
    %1239 = vmatpush1.msra.mxu0 0.0
    %1240 = vmatprep.subr.mxu0 0.0
    %1241 = vmatpush1.msra.mxu0 0.0
    %1242 = vmatprep.subr.mxu0 0.0
    %1243 = vmatpush1.msra.mxu0 0.0
    %1244 = vmatprep.subr.mxu0 0.0
    %1245 = vmatpush1.msra.mxu0 0.0
    %1246 = vmatprep.subr.mxu0 0.0
    %1247 = vmatpush1.msra.mxu0 0.0
    %1248 = vmatprep.subr.mxu0 0.0
    %1249 = vmatpush1.msra.mxu0 0.0
    %1250 = vmatprep.subr.mxu0 0.0
    %1251 = vmatpush1.msra.mxu0 0.0
    %1252 = vmatprep.subr.mxu0 0.0
    %1253 = vmatpush1.msra.mxu0 0.0
    %1254 = vmatprep.subr.mxu0 0.0
    %1255 = vmatpush1.msra.mxu0 0.0
    %1256 = vmatprep.subr.mxu0 0.0
    %1257 = vmatpush1.msra.mxu0 0.0
    %1258 = vmatprep.subr.mxu0 0.0
    %1259 = vmatpush1.msra.mxu0 0.0
    %1260 = vmatprep.subr.mxu0 0.0
    %1261 = vmatpush1.msra.mxu0 0.0
    %1262 = vmatprep.subr.mxu0 0.0
    %1263 = vmatpush1.msra.mxu0 0.0
    %1264 = vmatprep.subr.mxu0 0.0
    %1265 = vmatpush1.msra.mxu0 0.0
    %1266 = vmatprep.subr.mxu0 0.0
    %1267 = vmatpush1.msra.mxu0 0.0
    %1268 = vmatprep.subr.mxu0 0.0
    %1269 = vmatpush1.msra.mxu0 0.0
    %1270 = vmatprep.subr.mxu0 0.0
    %1271 = vmatpush1.msra.mxu0 0.0
    %1272 = vmatprep.subr.mxu0 0.0
    %1273 = vmatpush1.msra.mxu0 0.0
    %1274 = vmatprep.mubr.f32.mxu0 0.0
    %1275 = vmatmul.mubr.f32.gmra.mrb[0].mxu0 %v1208
    %v1276 = vpop.f32.mrb[0].mxu0
    %v1277 = vadd.f32 0.0, %v1276
    %v1278 = vpop.f32.mrb[0].mxu0
    %1279 = vdwg.mxu0
    %v1281 = vrot.slane %v1277, 6
    %v1283 = vadd.f32 %v1098, %v1281
    %v1284 = vxor.u32 %v1283, 2147483648
    %v1285 = vmul.f32 %v1284, 1.442695
    %v1286 = vpow.pop %v1285
    %v1287 = vadd.f32 %v1286, 1.0
    %v1288 = vrcp.pop %v1287
    %v1289 = vmul.f32 1.0, %v1288
    %v1290 = vtanh.pop %v1283
    %v1292 = vrot.slane %v1198, 6
    %v1294 = vmul.f32 %v1289, %v1292
    %1296 = vrot.lane.b32.xlu0 %v1290, 64
    %v1297 = vpop.permute.xlu0 %1296
    %v1299 = vmul.f32 %v1289, %v1297
    %1301 = vrot.lane.b32.xlu0 %v1299, 32
    %v1302 = vpop.permute.xlu0 %1301
    %v1304 = vadd.f32 %v1294, %v1302
    %v1305 = vtanh.pop %v1304
    %1307 = vrot.lane.b32.xlu0 %v1305, 64
    %v1308 = vpop.permute.xlu0 %1307
    %v1310 = vmul.f32 %v1289, %v1308
    %v1312 = vrot.slane %v1310, 2
    %1313 = vrot.lane.b32.xlu0 %v1312, 32
    %v1314 = vpop.permute.xlu0 %1313
    %v1315 = vsel %vm159, %v1314, 0
    %1317 = vmatprep.subr.mxu0 0.0
    %1318 = vmatpush1.msra.mxu0 %v1106
    %1319 = vmatprep.subr.mxu0 0.0
    %1320 = vmatpush1.msra.mxu0 %v1107
    %1321 = vmatprep.subr.mxu0 0.0
    %1322 = vmatpush1.msra.mxu0 %v1108
    %1323 = vmatprep.subr.mxu0 0.0
    %1324 = vmatpush1.msra.mxu0 %v1109
    %1325 = vmatprep.subr.mxu0 0.0
    %1326 = vmatpush1.msra.mxu0 0.0
    %1327 = vmatprep.subr.mxu0 0.0
    %1328 = vmatpush1.msra.mxu0 0.0
    %1329 = vmatprep.subr.mxu0 0.0
    %1330 = vmatpush1.msra.mxu0 0.0
    %1331 = vmatprep.subr.mxu0 0.0
    %1332 = vmatpush1.msra.mxu0 0.0
    %1333 = vmatprep.subr.mxu0 0.0
    %1334 = vmatpush1.msra.mxu0 0.0
    %1335 = vmatprep.subr.mxu0 0.0
    %1336 = vmatpush1.msra.mxu0 0.0
    %1337 = vmatprep.subr.mxu0 0.0
    %1338 = vmatpush1.msra.mxu0 0.0
    %1339 = vmatprep.subr.mxu0 0.0
    %1340 = vmatpush1.msra.mxu0 0.0
    %1341 = vmatprep.subr.mxu0 0.0
    %1342 = vmatpush1.msra.mxu0 0.0
    %1343 = vmatprep.subr.mxu0 0.0
    %1344 = vmatpush1.msra.mxu0 0.0
    %1345 = vmatprep.subr.mxu0 0.0
    %1346 = vmatpush1.msra.mxu0 0.0
    %1347 = vmatprep.subr.mxu0 0.0
    %1348 = vmatpush1.msra.mxu0 0.0
    %1349 = vmatprep.subr.mxu0 0.0
    %1350 = vmatpush1.msra.mxu0 0.0
    %1351 = vmatprep.subr.mxu0 0.0
    %1352 = vmatpush1.msra.mxu0 0.0
    %1353 = vmatprep.subr.mxu0 0.0
    %1354 = vmatpush1.msra.mxu0 0.0
    %1355 = vmatprep.subr.mxu0 0.0
    %1356 = vmatpush1.msra.mxu0 0.0
    %1357 = vmatprep.subr.mxu0 0.0
    %1358 = vmatpush1.msra.mxu0 0.0
    %1359 = vmatprep.subr.mxu0 0.0
    %1360 = vmatpush1.msra.mxu0 0.0
    %1361 = vmatprep.subr.mxu0 0.0
    %1362 = vmatpush1.msra.mxu0 0.0
    %1363 = vmatprep.subr.mxu0 0.0
    %1364 = vmatpush1.msra.mxu0 0.0
    %1365 = vmatprep.subr.mxu0 0.0
    %1366 = vmatpush1.msra.mxu0 0.0
    %1367 = vmatprep.subr.mxu0 0.0
    %1368 = vmatpush1.msra.mxu0 0.0
    %1369 = vmatprep.subr.mxu0 0.0
    %1370 = vmatpush1.msra.mxu0 0.0
    %1371 = vmatprep.subr.mxu0 0.0
    %1372 = vmatpush1.msra.mxu0 0.0
    %1373 = vmatprep.subr.mxu0 0.0
    %1374 = vmatpush1.msra.mxu0 0.0
    %1375 = vmatprep.subr.mxu0 0.0
    %1376 = vmatpush1.msra.mxu0 0.0
    %1377 = vmatprep.subr.mxu0 0.0
    %1378 = vmatpush1.msra.mxu0 0.0
    %1379 = vmatprep.subr.mxu0 0.0
    %1380 = vmatpush1.msra.mxu0 0.0
    %1381 = vmatprep.mubr.f32.mxu0 0.0
    %1382 = vmatmul.mubr.f32.gmra.mrb[0].mxu0 %v1315
    %v1383 = vpop.f32.mrb[0].mxu0
    %v1384 = vadd.f32 0.0, %v1383
    %v1385 = vpop.f32.mrb[0].mxu0
    %1386 = vdwg.mxu0
    %v1388 = vrot.slane %v1384, 4
    %v1390 = vadd.f32 %v1098, %v1388
    %v1391 = vxor.u32 %v1390, 2147483648
    %v1392 = vmul.f32 %v1391, 1.442695
    %v1393 = vpow.pop %v1392
    %v1394 = vadd.f32 %v1393, 1.0
    %v1395 = vrcp.pop %v1394
    %v1396 = vmul.f32 1.0, %v1395
    %v1397 = vtanh.pop %v1390
    %v1399 = vrot.slane %v1304, 6
    %v1401 = vmul.f32 %v1396, %v1399
    %1403 = vrot.lane.b32.xlu0 %v1397, 64
    %v1404 = vpop.permute.xlu0 %1403
    %v1406 = vmul.f32 %v1396, %v1404
    %1408 = vrot.lane.b32.xlu0 %v1406, 32
    %v1409 = vpop.permute.xlu0 %1408
    %v1411 = vadd.f32 %v1401, %v1409
    %v1412 = vtanh.pop %v1411
    %1414 = vrot.lane.b32.xlu0 %v1412, 64
    %v1415 = vpop.permute.xlu0 %1414
    %v1417 = vmul.f32 %v1396, %v1415
    %v1419 = vrot.slane %v1417, 4
    %1420 = vrot.lane.b32.xlu0 %v1419, 32
    %v1421 = vpop.permute.xlu0 %1420
    %v1422 = vsel %vm159, %v1421, 0
    %1424 = vmatprep.subr.mxu0 0.0
    %1425 = vmatpush1.msra.mxu0 %v1106
    %1426 = vmatprep.subr.mxu0 0.0
    %1427 = vmatpush1.msra.mxu0 %v1107
    %1428 = vmatprep.subr.mxu0 0.0
    %1429 = vmatpush1.msra.mxu0 %v1108
    %1430 = vmatprep.subr.mxu0 0.0
    %1431 = vmatpush1.msra.mxu0 %v1109
    %1432 = vmatprep.subr.mxu0 0.0
    %1433 = vmatpush1.msra.mxu0 0.0
    %1434 = vmatprep.subr.mxu0 0.0
    %1435 = vmatpush1.msra.mxu0 0.0
    %1436 = vmatprep.subr.mxu0 0.0
    %1437 = vmatpush1.msra.mxu0 0.0
    %1438 = vmatprep.subr.mxu0 0.0
    %1439 = vmatpush1.msra.mxu0 0.0
    %1440 = vmatprep.subr.mxu0 0.0
    %1441 = vmatpush1.msra.mxu0 0.0
    %1442 = vmatprep.subr.mxu0 0.0
    %1443 = vmatpush1.msra.mxu0 0.0
    %1444 = vmatprep.subr.mxu0 0.0
    %1445 = vmatpush1.msra.mxu0 0.0
    %1446 = vmatprep.subr.mxu0 0.0
    %1447 = vmatpush1.msra.mxu0 0.0
    %1448 = vmatprep.subr.mxu0 0.0
    %1449 = vmatpush1.msra.mxu0 0.0
    %1450 = vmatprep.subr.mxu0 0.0
    %1451 = vmatpush1.msra.mxu0 0.0
    %1452 = vmatprep.subr.mxu0 0.0
    %1453 = vmatpush1.msra.mxu0 0.0
    %1454 = vmatprep.subr.mxu0 0.0
    %1455 = vmatpush1.msra.mxu0 0.0
    %1456 = vmatprep.subr.mxu0 0.0
    %1457 = vmatpush1.msra.mxu0 0.0
    %1458 = vmatprep.subr.mxu0 0.0
    %1459 = vmatpush1.msra.mxu0 0.0
    %1460 = vmatprep.subr.mxu0 0.0
    %1461 = vmatpush1.msra.mxu0 0.0
    %1462 = vmatprep.subr.mxu0 0.0
    %1463 = vmatpush1.msra.mxu0 0.0
    %1464 = vmatprep.subr.mxu0 0.0
    %1465 = vmatpush1.msra.mxu0 0.0
    %1466 = vmatprep.subr.mxu0 0.0
    %1467 = vmatpush1.msra.mxu0 0.0
    %1468 = vmatprep.subr.mxu0 0.0
    %1469 = vmatpush1.msra.mxu0 0.0
    %1470 = vmatprep.subr.mxu0 0.0
    %1471 = vmatpush1.msra.mxu0 0.0
    %1472 = vmatprep.subr.mxu0 0.0
    %1473 = vmatpush1.msra.mxu0 0.0
    %1474 = vmatprep.subr.mxu0 0.0
    %1475 = vmatpush1.msra.mxu0 0.0
    %1476 = vmatprep.subr.mxu0 0.0
    %1477 = vmatpush1.msra.mxu0 0.0
    %1478 = vmatprep.subr.mxu0 0.0
    %1479 = vmatpush1.msra.mxu0 0.0
    %1480 = vmatprep.subr.mxu0 0.0
    %1481 = vmatpush1.msra.mxu0 0.0
    %1482 = vmatprep.subr.mxu0 0.0
    %1483 = vmatpush1.msra.mxu0 0.0
    %1484 = vmatprep.subr.mxu0 0.0
    %1485 = vmatpush1.msra.mxu0 0.0
    %1486 = vmatprep.subr.mxu0 0.0
    %1487 = vmatpush1.msra.mxu0 0.0
    %1488 = vmatprep.mubr.f32.mxu0 0.0
    %1489 = vmatmul.mubr.f32.gmra.mrb[0].mxu0 %v1422
    %v1490 = vpop.f32.mrb[0].mxu0
    %v1491 = vadd.f32 0.0, %v1490
    %v1492 = vpop.f32.mrb[0].mxu0
    %1493 = vdwg.mxu0
    %v1495 = vrot.slane %v1491, 2
    %v1497 = vadd.f32 %v1098, %v1495
    %v1498 = vxor.u32 %v1497, 2147483648
    %v1499 = vmul.f32 %v1498, 1.442695
    %v1500 = vpow.pop %v1499
    %v1501 = vadd.f32 %v1500, 1.0
    %v1502 = vrcp.pop %v1501
    %v1503 = vmul.f32 1.0, %v1502
    %v1504 = vtanh.pop %v1497
    %v1506 = vrot.slane %v1411, 6
    %v1508 = vmul.f32 %v1503, %v1506
    %1510 = vrot.lane.b32.xlu0 %v1504, 64
    %v1511 = vpop.permute.xlu0 %1510
    %v1513 = vmul.f32 %v1503, %v1511
    %1515 = vrot.lane.b32.xlu0 %v1513, 32
    %v1516 = vpop.permute.xlu0 %1515
    %v1518 = vadd.f32 %v1508, %v1516
    %v1519 = vtanh.pop %v1518
    %1521 = vrot.lane.b32.xlu0 %v1519, 64
    %v1522 = vpop.permute.xlu0 %1521
    %v1524 = vmul.f32 %v1503, %v1522
    %v1526 = vrot.slane %v1524, 6
    %1527 = vrot.lane.b32.xlu0 %v1526, 32
    %v1528 = vpop.permute.xlu0 %1527
    %v1529 = vsel %vm159, %v1528, 0
    %1531 = vmatprep.subr.mxu0 0.0
    %1532 = vmatpush1.msra.mxu0 %v1106
    %1533 = vmatprep.subr.mxu0 0.0
    %1534 = vmatpush1.msra.mxu0 %v1107
    %1535 = vmatprep.subr.mxu0 0.0
    %1536 = vmatpush1.msra.mxu0 %v1108
    %1537 = vmatprep.subr.mxu0 0.0
    %1538 = vmatpush1.msra.mxu0 %v1109
    %1539 = vmatprep.subr.mxu0 0.0
    %1540 = vmatpush1.msra.mxu0 0.0
    %1541 = vmatprep.subr.mxu0 0.0
    %1542 = vmatpush1.msra.mxu0 0.0
    %1543 = vmatprep.subr.mxu0 0.0
    %1544 = vmatpush1.msra.mxu0 0.0
    %1545 = vmatprep.subr.mxu0 0.0
    %1546 = vmatpush1.msra.mxu0 0.0
    %1547 = vmatprep.subr.mxu0 0.0
    %1548 = vmatpush1.msra.mxu0 0.0
    %1549 = vmatprep.subr.mxu0 0.0
    %1550 = vmatpush1.msra.mxu0 0.0
    %1551 = vmatprep.subr.mxu0 0.0
    %1552 = vmatpush1.msra.mxu0 0.0
    %1553 = vmatprep.subr.mxu0 0.0
    %1554 = vmatpush1.msra.mxu0 0.0
    %1555 = vmatprep.subr.mxu0 0.0
    %1556 = vmatpush1.msra.mxu0 0.0
    %1557 = vmatprep.subr.mxu0 0.0
    %1558 = vmatpush1.msra.mxu0 0.0
    %1559 = vmatprep.subr.mxu0 0.0
    %1560 = vmatpush1.msra.mxu0 0.0
    %1561 = vmatprep.subr.mxu0 0.0
    %1562 = vmatpush1.msra.mxu0 0.0
    %1563 = vmatprep.subr.mxu0 0.0
    %1564 = vmatpush1.msra.mxu0 0.0
    %1565 = vmatprep.subr.mxu0 0.0
    %1566 = vmatpush1.msra.mxu0 0.0
    %1567 = vmatprep.subr.mxu0 0.0
    %1568 = vmatpush1.msra.mxu0 0.0
    %1569 = vmatprep.subr.mxu0 0.0
    %1570 = vmatpush1.msra.mxu0 0.0
    %1571 = vmatprep.subr.mxu0 0.0
    %1572 = vmatpush1.msra.mxu0 0.0
    %1573 = vmatprep.subr.mxu0 0.0
    %1574 = vmatpush1.msra.mxu0 0.0
    %1575 = vmatprep.subr.mxu0 0.0
    %1576 = vmatpush1.msra.mxu0 0.0
    %1577 = vmatprep.subr.mxu0 0.0
    %1578 = vmatpush1.msra.mxu0 0.0
    %1579 = vmatprep.subr.mxu0 0.0
    %1580 = vmatpush1.msra.mxu0 0.0
    %1581 = vmatprep.subr.mxu0 0.0
    %1582 = vmatpush1.msra.mxu0 0.0
    %1583 = vmatprep.subr.mxu0 0.0
    %1584 = vmatpush1.msra.mxu0 0.0
    %1585 = vmatprep.subr.mxu0 0.0
    %1586 = vmatpush1.msra.mxu0 0.0
    %1587 = vmatprep.subr.mxu0 0.0
    %1588 = vmatpush1.msra.mxu0 0.0
    %1589 = vmatprep.subr.mxu0 0.0
    %1590 = vmatpush1.msra.mxu0 0.0
    %1591 = vmatprep.subr.mxu0 0.0
    %1592 = vmatpush1.msra.mxu0 0.0
    %1593 = vmatprep.subr.mxu0 0.0
    %1594 = vmatpush1.msra.mxu0 0.0
    %1595 = vmatprep.mubr.f32.mxu0 0.0
    %1596 = vmatmul.mubr.f32.gmra.mrb[0].mxu0 %v1529
    %v1597 = vpop.f32.mrb[0].mxu0
    %v1598 = vadd.f32 0.0, %v1597
    %v1599 = vpop.f32.mrb[0].mxu0
    %1600 = vdwg.mxu0
    %v1601 = vadd.f32 %v1103, %v1598
    %v1602 = vxor.u32 %v1601, 2147483648
    %v1603 = vmul.f32 %v1602, 1.442695
    %v1604 = vpow.pop %v1603
    %v1605 = vadd.f32 %v1604, 1.0
    %v1606 = vrcp.pop %v1605
    %v1607 = vmul.f32 1.0, %v1606
    %v1608 = vtanh.pop %v1601
    %v1610 = vrot.slane %v1518, 6
    %v1612 = vmul.f32 %v1607, %v1610
    %1614 = vrot.lane.b32.xlu0 %v1608, 64
    %v1615 = vpop.permute.xlu0 %1614
    %v1617 = vmul.f32 %v1607, %v1615
    %1619 = vrot.lane.b32.xlu0 %v1617, 32
    %v1620 = vpop.permute.xlu0 %1619
    %v1622 = vadd.f32 %v1612, %v1620
    %v1623 = vtanh.pop %v1622
    %1625 = vrot.lane.b32.xlu0 %v1623, 64
    %v1626 = vpop.permute.xlu0 %1625
    %v1628 = vmul.f32 %v1607, %v1626
    %1630 = vrot.lane.b32.xlu0 %v1628, 32
    %v1631 = vpop.permute.xlu0 %1630
    %v1632 = vsel %vm159, %v1631, 0
    %1634 = vmatprep.subr.mxu0 0.0
    %1635 = vmatpush1.msra.mxu0 %v1106
    %1636 = vmatprep.subr.mxu0 0.0
    %1637 = vmatpush1.msra.mxu0 %v1107
    %1638 = vmatprep.subr.mxu0 0.0
    %1639 = vmatpush1.msra.mxu0 %v1108
    %1640 = vmatprep.subr.mxu0 0.0
    %1641 = vmatpush1.msra.mxu0 %v1109
    %1642 = vmatprep.subr.mxu0 0.0
    %1643 = vmatpush1.msra.mxu0 0.0
    %1644 = vmatprep.subr.mxu0 0.0
    %1645 = vmatpush1.msra.mxu0 0.0
    %1646 = vmatprep.subr.mxu0 0.0
    %1647 = vmatpush1.msra.mxu0 0.0
    %1648 = vmatprep.subr.mxu0 0.0
    %1649 = vmatpush1.msra.mxu0 0.0
    %1650 = vmatprep.subr.mxu0 0.0
    %1651 = vmatpush1.msra.mxu0 0.0
    %1652 = vmatprep.subr.mxu0 0.0
    %1653 = vmatpush1.msra.mxu0 0.0
    %1654 = vmatprep.subr.mxu0 0.0
    %1655 = vmatpush1.msra.mxu0 0.0
    %1656 = vmatprep.subr.mxu0 0.0
    %1657 = vmatpush1.msra.mxu0 0.0
    %1658 = vmatprep.subr.mxu0 0.0
    %1659 = vmatpush1.msra.mxu0 0.0
    %1660 = vmatprep.subr.mxu0 0.0
    %1661 = vmatpush1.msra.mxu0 0.0
    %1662 = vmatprep.subr.mxu0 0.0
    %1663 = vmatpush1.msra.mxu0 0.0
    %1664 = vmatprep.subr.mxu0 0.0
    %1665 = vmatpush1.msra.mxu0 0.0
    %1666 = vmatprep.subr.mxu0 0.0
    %1667 = vmatpush1.msra.mxu0 0.0
    %1668 = vmatprep.subr.mxu0 0.0
    %1669 = vmatpush1.msra.mxu0 0.0
    %1670 = vmatprep.subr.mxu0 0.0
    %1671 = vmatpush1.msra.mxu0 0.0
    %1672 = vmatprep.subr.mxu0 0.0
    %1673 = vmatpush1.msra.mxu0 0.0
    %1674 = vmatprep.subr.mxu0 0.0
    %1675 = vmatpush1.msra.mxu0 0.0
    %1676 = vmatprep.subr.mxu0 0.0
    %1677 = vmatpush1.msra.mxu0 0.0
    %1678 = vmatprep.subr.mxu0 0.0
    %1679 = vmatpush1.msra.mxu0 0.0
    %1680 = vmatprep.subr.mxu0 0.0
    %1681 = vmatpush1.msra.mxu0 0.0
    %1682 = vmatprep.subr.mxu0 0.0
    %1683 = vmatpush1.msra.mxu0 0.0
    %1684 = vmatprep.subr.mxu0 0.0
    %1685 = vmatpush1.msra.mxu0 0.0
    %1686 = vmatprep.subr.mxu0 0.0
    %1687 = vmatpush1.msra.mxu0 0.0
    %1688 = vmatprep.subr.mxu0 0.0
    %1689 = vmatpush1.msra.mxu0 0.0
    %1690 = vmatprep.subr.mxu0 0.0
    %1691 = vmatpush1.msra.mxu0 0.0
    %1692 = vmatprep.subr.mxu0 0.0
    %1693 = vmatpush1.msra.mxu0 0.0
    %1694 = vmatprep.subr.mxu0 0.0
    %1695 = vmatpush1.msra.mxu0 0.0
    %1696 = vmatprep.subr.mxu0 0.0
    %1697 = vmatpush1.msra.mxu0 0.0
    %1698 = vmatprep.mubr.f32.mxu0 0.0
    %1699 = vmatmul.mubr.f32.gmra.mrb[0].mxu0 %v1632
    %v1700 = vpop.f32.mrb[0].mxu0
    %v1701 = vadd.f32 0.0, %v1700
    %v1702 = vpop.f32.mrb[0].mxu0
    %1703 = vdwg.mxu0
    %v1705 = vrot.slane %v1701, 6
    %v1707 = vadd.f32 %v1103, %v1705
    %v1708 = vxor.u32 %v1707, 2147483648
    %v1709 = vmul.f32 %v1708, 1.442695
    %v1710 = vpow.pop %v1709
    %v1711 = vadd.f32 %v1710, 1.0
    %v1712 = vrcp.pop %v1711
    %v1713 = vmul.f32 1.0, %v1712
    %v1714 = vtanh.pop %v1707
    %v1716 = vrot.slane %v1622, 6
    %v1718 = vmul.f32 %v1713, %v1716
    %1720 = vrot.lane.b32.xlu0 %v1714, 64
    %v1721 = vpop.permute.xlu0 %1720
    %v1723 = vmul.f32 %v1713, %v1721
    %1725 = vrot.lane.b32.xlu0 %v1723, 32
    %v1726 = vpop.permute.xlu0 %1725
    %v1728 = vadd.f32 %v1718, %v1726
    %v1729 = vtanh.pop %v1728
    %1731 = vrot.lane.b32.xlu0 %v1729, 64
    %v1732 = vpop.permute.xlu0 %1731
    %v1734 = vmul.f32 %v1713, %v1732
    %v1736 = vrot.slane %v1734, 2
    %1737 = vrot.lane.b32.xlu0 %v1736, 32
    %v1738 = vpop.permute.xlu0 %1737
    %v1739 = vsel %vm159, %v1738, 0
    %1741 = vmatprep.subr.mxu0 0.0
    %1742 = vmatpush1.msra.mxu0 %v1106
    %1743 = vmatprep.subr.mxu0 0.0
    %1744 = vmatpush1.msra.mxu0 %v1107
    %1745 = vmatprep.subr.mxu0 0.0
    %1746 = vmatpush1.msra.mxu0 %v1108
    %1747 = vmatprep.subr.mxu0 0.0
    %1748 = vmatpush1.msra.mxu0 %v1109
    %1749 = vmatprep.subr.mxu0 0.0
    %1750 = vmatpush1.msra.mxu0 0.0
    %1751 = vmatprep.subr.mxu0 0.0
    %1752 = vmatpush1.msra.mxu0 0.0
    %1753 = vmatprep.subr.mxu0 0.0
    %1754 = vmatpush1.msra.mxu0 0.0
    %1755 = vmatprep.subr.mxu0 0.0
    %1756 = vmatpush1.msra.mxu0 0.0
    %1757 = vmatprep.subr.mxu0 0.0
    %1758 = vmatpush1.msra.mxu0 0.0
    %1759 = vmatprep.subr.mxu0 0.0
    %1760 = vmatpush1.msra.mxu0 0.0
    %1761 = vmatprep.subr.mxu0 0.0
    %1762 = vmatpush1.msra.mxu0 0.0
    %1763 = vmatprep.subr.mxu0 0.0
    %1764 = vmatpush1.msra.mxu0 0.0
    %1765 = vmatprep.subr.mxu0 0.0
    %1766 = vmatpush1.msra.mxu0 0.0
    %1767 = vmatprep.subr.mxu0 0.0
    %1768 = vmatpush1.msra.mxu0 0.0
    %1769 = vmatprep.subr.mxu0 0.0
    %1770 = vmatpush1.msra.mxu0 0.0
    %1771 = vmatprep.subr.mxu0 0.0
    %1772 = vmatpush1.msra.mxu0 0.0
    %1773 = vmatprep.subr.mxu0 0.0
    %1774 = vmatpush1.msra.mxu0 0.0
    %1775 = vmatprep.subr.mxu0 0.0
    %1776 = vmatpush1.msra.mxu0 0.0
    %1777 = vmatprep.subr.mxu0 0.0
    %1778 = vmatpush1.msra.mxu0 0.0
    %1779 = vmatprep.subr.mxu0 0.0
    %1780 = vmatpush1.msra.mxu0 0.0
    %1781 = vmatprep.subr.mxu0 0.0
    %1782 = vmatpush1.msra.mxu0 0.0
    %1783 = vmatprep.subr.mxu0 0.0
    %1784 = vmatpush1.msra.mxu0 0.0
    %1785 = vmatprep.subr.mxu0 0.0
    %1786 = vmatpush1.msra.mxu0 0.0
    %1787 = vmatprep.subr.mxu0 0.0
    %1788 = vmatpush1.msra.mxu0 0.0
    %1789 = vmatprep.subr.mxu0 0.0
    %1790 = vmatpush1.msra.mxu0 0.0
    %1791 = vmatprep.subr.mxu0 0.0
    %1792 = vmatpush1.msra.mxu0 0.0
    %1793 = vmatprep.subr.mxu0 0.0
    %1794 = vmatpush1.msra.mxu0 0.0
    %1795 = vmatprep.subr.mxu0 0.0
    %1796 = vmatpush1.msra.mxu0 0.0
    %1797 = vmatprep.subr.mxu0 0.0
    %1798 = vmatpush1.msra.mxu0 0.0
    %1799 = vmatprep.subr.mxu0 0.0
    %1800 = vmatpush1.msra.mxu0 0.0
    %1801 = vmatprep.subr.mxu0 0.0
    %1802 = vmatpush1.msra.mxu0 0.0
    %1803 = vmatprep.subr.mxu0 0.0
    %1804 = vmatpush1.msra.mxu0 0.0
    %1805 = vmatprep.mubr.f32.mxu0 0.0
    %1806 = vmatmul.mubr.f32.gmra.mrb[0].mxu0 %v1739
    %v1807 = vpop.f32.mrb[0].mxu0
    %v1808 = vadd.f32 0.0, %v1807
    %v1809 = vpop.f32.mrb[0].mxu0
    %1810 = vdwg.mxu0
    %v1812 = vrot.slane %v1808, 4
    %v1814 = vadd.f32 %v1103, %v1812
    %v1815 = vxor.u32 %v1814, 2147483648
    %v1816 = vmul.f32 %v1815, 1.442695
    %v1817 = vpow.pop %v1816
    %v1818 = vadd.f32 %v1817, 1.0
    %v1819 = vrcp.pop %v1818
    %v1820 = vmul.f32 1.0, %v1819
    %v1821 = vtanh.pop %v1814
    %v1823 = vrot.slane %v1728, 6
    %v1825 = vmul.f32 %v1820, %v1823
    %1827 = vrot.lane.b32.xlu0 %v1821, 64
    %v1828 = vpop.permute.xlu0 %1827
    %v1830 = vmul.f32 %v1820, %v1828
    %1832 = vrot.lane.b32.xlu0 %v1830, 32
    %v1833 = vpop.permute.xlu0 %1832
    %v1835 = vadd.f32 %v1825, %v1833
    %v1836 = vtanh.pop %v1835
    %1838 = vrot.lane.b32.xlu0 %v1836, 64
    %v1839 = vpop.permute.xlu0 %1838
    %v1841 = vmul.f32 %v1820, %v1839
    %v1843 = vrot.slane %v1841, 4
    %1844 = vrot.lane.b32.xlu0 %v1843, 32
    %v1845 = vpop.permute.xlu0 %1844
    %v1846 = vsel %vm159, %v1845, 0
    %1848 = vmatprep.subr.mxu0 0.0
    %1849 = vmatpush1.msra.mxu0 %v1106
    %1850 = vmatprep.subr.mxu0 0.0
    %1851 = vmatpush1.msra.mxu0 %v1107
    %1852 = vmatprep.subr.mxu0 0.0
    %1853 = vmatpush1.msra.mxu0 %v1108
    %1854 = vmatprep.subr.mxu0 0.0
    %1855 = vmatpush1.msra.mxu0 %v1109
    %1856 = vmatprep.subr.mxu0 0.0
    %1857 = vmatpush1.msra.mxu0 0.0
    %1858 = vmatprep.subr.mxu0 0.0
    %1859 = vmatpush1.msra.mxu0 0.0
    %1860 = vmatprep.subr.mxu0 0.0
    %1861 = vmatpush1.msra.mxu0 0.0
    %1862 = vmatprep.subr.mxu0 0.0
    %1863 = vmatpush1.msra.mxu0 0.0
    %1864 = vmatprep.subr.mxu0 0.0
    %1865 = vmatpush1.msra.mxu0 0.0
    %1866 = vmatprep.subr.mxu0 0.0
    %1867 = vmatpush1.msra.mxu0 0.0
    %1868 = vmatprep.subr.mxu0 0.0
    %1869 = vmatpush1.msra.mxu0 0.0
    %1870 = vmatprep.subr.mxu0 0.0
    %1871 = vmatpush1.msra.mxu0 0.0
    %1872 = vmatprep.subr.mxu0 0.0
    %1873 = vmatpush1.msra.mxu0 0.0
    %1874 = vmatprep.subr.mxu0 0.0
    %1875 = vmatpush1.msra.mxu0 0.0
    %1876 = vmatprep.subr.mxu0 0.0
    %1877 = vmatpush1.msra.mxu0 0.0
    %1878 = vmatprep.subr.mxu0 0.0
    %1879 = vmatpush1.msra.mxu0 0.0
    %1880 = vmatprep.subr.mxu0 0.0
    %1881 = vmatpush1.msra.mxu0 0.0
    %1882 = vmatprep.subr.mxu0 0.0
    %1883 = vmatpush1.msra.mxu0 0.0
    %1884 = vmatprep.subr.mxu0 0.0
    %1885 = vmatpush1.msra.mxu0 0.0
    %1886 = vmatprep.subr.mxu0 0.0
    %1887 = vmatpush1.msra.mxu0 0.0
    %1888 = vmatprep.subr.mxu0 0.0
    %1889 = vmatpush1.msra.mxu0 0.0
    %1890 = vmatprep.subr.mxu0 0.0
    %1891 = vmatpush1.msra.mxu0 0.0
    %1892 = vmatprep.subr.mxu0 0.0
    %1893 = vmatpush1.msra.mxu0 0.0
    %1894 = vmatprep.subr.mxu0 0.0
    %1895 = vmatpush1.msra.mxu0 0.0
    %1896 = vmatprep.subr.mxu0 0.0
    %1897 = vmatpush1.msra.mxu0 0.0
    %1898 = vmatprep.subr.mxu0 0.0
    %1899 = vmatpush1.msra.mxu0 0.0
    %1900 = vmatprep.subr.mxu0 0.0
    %1901 = vmatpush1.msra.mxu0 0.0
    %1902 = vmatprep.subr.mxu0 0.0
    %1903 = vmatpush1.msra.mxu0 0.0
    %1904 = vmatprep.subr.mxu0 0.0
    %1905 = vmatpush1.msra.mxu0 0.0
    %1906 = vmatprep.subr.mxu0 0.0
    %1907 = vmatpush1.msra.mxu0 0.0
    %1908 = vmatprep.subr.mxu0 0.0
    %1909 = vmatpush1.msra.mxu0 0.0
    %1910 = vmatprep.subr.mxu0 0.0
    %1911 = vmatpush1.msra.mxu0 0.0
    %1912 = vmatprep.mubr.f32.mxu0 0.0
    %1913 = vmatmul.mubr.f32.gmra.mrb[0].mxu0 %v1846
    %v1914 = vpop.f32.mrb[0].mxu0
    %v1915 = vadd.f32 0.0, %v1914
    %v1916 = vpop.f32.mrb[0].mxu0
    %1917 = vdwg.mxu0
    %v1919 = vrot.slane %v1915, 2
    %v1921 = vadd.f32 %v1103, %v1919
    %v1922 = vxor.u32 %v1921, 2147483648
    %v1923 = vmul.f32 %v1922, 1.442695
    %v1924 = vpow.pop %v1923
    %v1925 = vadd.f32 %v1924, 1.0
    %v1926 = vrcp.pop %v1925
    %v1927 = vmul.f32 1.0, %v1926
    %v1928 = vtanh.pop %v1921
    %v1930 = vrot.slane %v1835, 6
    %v1932 = vmul.f32 %v1927, %v1930
    %1934 = vrot.lane.b32.xlu0 %v1928, 64
    %v1935 = vpop.permute.xlu0 %1934
    %v1937 = vmul.f32 %v1927, %v1935
    %1939 = vrot.lane.b32.xlu0 %v1937, 32
    %v1940 = vpop.permute.xlu0 %1939
    %v1942 = vadd.f32 %v1932, %v1940
    %v1943 = vtanh.pop %v1942
    %1945 = vrot.lane.b32.xlu0 %v1943, 64
    %v1946 = vpop.permute.xlu0 %1945
    %v1948 = vmul.f32 %v1927, %v1946
    %v1949 = vld [vmem:[%s7] sm:$0xff]
    %v1950 = vld [vmem:[%s7 + $0x8] sm:$0xff]
    %v1951 = vld [vmem:[%s7 + $0x10] sm:$0xff]
    %v1952 = vld [vmem:[%s7 + $0x18] sm:$0xff]
    %v1953 = vld [vmem:[%s8] sm:$0x1]
    %v1955 = vlaneseq
    %v1956 = vshrl.u32 %v1955, 7
    %v1957 = vsub.s32 0, %v1956
    %v1958 = vrot.slane %v1953, %v1957
    %v1961 = vrot.slane %v1948, 6
    %1962 = vrot.lane.b32.xlu0 %v1961, 32
    %v1963 = vpop.permute.xlu0 %1962
    %v1964 = vsel %vm159, %v1963, 0
    %1966 = vmatprep.subr.mxu0 0.0
    %1967 = vmatpush1.msra.mxu0 %v1949
    %1968 = vmatprep.subr.mxu0 0.0
    %1969 = vmatpush1.msra.mxu0 %v1950
    %1970 = vmatprep.subr.mxu0 0.0
    %1971 = vmatpush1.msra.mxu0 %v1951
    %1972 = vmatprep.subr.mxu0 0.0
    %1973 = vmatpush1.msra.mxu0 %v1952
    %1974 = vmatprep.subr.mxu0 0.0
    %1975 = vmatpush1.msra.mxu0 0.0
    %1976 = vmatprep.subr.mxu0 0.0
    %1977 = vmatpush1.msra.mxu0 0.0
    %1978 = vmatprep.subr.mxu0 0.0
    %1979 = vmatpush1.msra.mxu0 0.0
    %1980 = vmatprep.subr.mxu0 0.0
    %1981 = vmatpush1.msra.mxu0 0.0
    %1982 = vmatprep.subr.mxu0 0.0
    %1983 = vmatpush1.msra.mxu0 0.0
    %1984 = vmatprep.subr.mxu0 0.0
    %1985 = vmatpush1.msra.mxu0 0.0
    %1986 = vmatprep.subr.mxu0 0.0
    %1987 = vmatpush1.msra.mxu0 0.0
    %1988 = vmatprep.subr.mxu0 0.0
    %1989 = vmatpush1.msra.mxu0 0.0
    %1990 = vmatprep.subr.mxu0 0.0
    %1991 = vmatpush1.msra.mxu0 0.0
    %1992 = vmatprep.subr.mxu0 0.0
    %1993 = vmatpush1.msra.mxu0 0.0
    %1994 = vmatprep.subr.mxu0 0.0
    %1995 = vmatpush1.msra.mxu0 0.0
    %1996 = vmatprep.subr.mxu0 0.0
    %1997 = vmatpush1.msra.mxu0 0.0
    %1998 = vmatprep.subr.mxu0 0.0
    %1999 = vmatpush1.msra.mxu0 0.0
    %2000 = vmatprep.subr.mxu0 0.0
    %2001 = vmatpush1.msra.mxu0 0.0
    %2002 = vmatprep.subr.mxu0 0.0
    %2003 = vmatpush1.msra.mxu0 0.0
    %2004 = vmatprep.subr.mxu0 0.0
    %2005 = vmatpush1.msra.mxu0 0.0
    %2006 = vmatprep.subr.mxu0 0.0
    %2007 = vmatpush1.msra.mxu0 0.0
    %2008 = vmatprep.subr.mxu0 0.0
    %2009 = vmatpush1.msra.mxu0 0.0
    %2010 = vmatprep.subr.mxu0 0.0
    %2011 = vmatpush1.msra.mxu0 0.0
    %2012 = vmatprep.subr.mxu0 0.0
    %2013 = vmatpush1.msra.mxu0 0.0
    %2014 = vmatprep.subr.mxu0 0.0
    %2015 = vmatpush1.msra.mxu0 0.0
    %2016 = vmatprep.subr.mxu0 0.0
    %2017 = vmatpush1.msra.mxu0 0.0
    %2018 = vmatprep.subr.mxu0 0.0
    %2019 = vmatpush1.msra.mxu0 0.0
    %2020 = vmatprep.subr.mxu0 0.0
    %2021 = vmatpush1.msra.mxu0 0.0
    %2022 = vmatprep.subr.mxu0 0.0
    %2023 = vmatpush1.msra.mxu0 0.0
    %2024 = vmatprep.subr.mxu0 0.0
    %2025 = vmatpush1.msra.mxu0 0.0
    %2026 = vmatprep.subr.mxu0 0.0
    %2027 = vmatpush1.msra.mxu0 0.0
    %2028 = vmatprep.subr.mxu0 0.0
    %2029 = vmatpush1.msra.mxu0 0.0
    %2030 = vmatprep.mubr.f32.mxu0 0.0
    %2031 = vmatmul.mubr.f32.gmra.mrb[0].mxu0 %v1964
    %v2032 = vpop.f32.mrb[0].mxu0
    %v2033 = vadd.f32 %v1958, %v2032
    %v2034 = vpop.f32.mrb[0].mxu0
    %2035 = vdwg.mxu0
    %vm2036 = vcmask 25600
    %2037 = vst.msk [vmem:[#allocation7] sm:$0x3] %vm2036, %v2033
    // Predicated region
    $region46: #{tpu_custom_call.1} parent=1 // pred_check
      _
    $region47: #{tpu_custom_call.1} parent=1 // pred_check_branch
      %2039 = sbr.rel (0) target = $region49
    $region48: #{tpu_custom_call.1} parent=1 // pred_region
      %s2041 = ssub.s32 32, 32
      %2042 = vsyncadd [#allocation4], %s2041
      %s2044 = sshll.u32 [#allocation7], 4
      %s2045 = int_to_ptr.vmem [resolvable:$true] %s2044
      %2047 = dma.vmem_to_hbm [thread:$0]  %s2045, 32, %s9, [#allocation4]
    $region49: #{tpu_custom_call.1} parent=1 // pred_fallthru
      _
    // Predicated region
    $region50: #{tpu_custom_call.1} parent=1 // pred_check
      _
    $region51: #{tpu_custom_call.1} parent=1 // pred_check_branch
      %2049 = sbr.rel (0) target = $region53
    $region52: #{tpu_custom_call.1} parent=1 // pred_region
      %2050 = dma.done [#allocation4], 32
    $region53: #{tpu_custom_call.1} parent=1 // pred_fallthru
      _
    %2051 = vsyncpa [#allocation3], 1
    %2052 = vsyncpa [#allocation6], 1
    %2053 = vsyncpa [#allocation4], 1

</llo_original>
